<compile_context>
chip_gen: v5e
topology: v5e:2x2
jax: 0.10.0
libtpu: 0.0.40
codegen_flags: <defaults>
</compile_context>

<pallas_src>
import functools

import jax
import jax.numpy as jnp
from jax.experimental import pallas as pl
from jax.experimental.pallas import tpu as pltpu


def _round_up(x, m):
    return (x + m - 1) // m * m


def _cparams(semantics, tile_bytes):
    """CompilerParams with an explicit VMEM budget (double-buffered tiles + slack)."""
    need = 6 * int(tile_bytes) + (8 << 20)
    return pltpu.CompilerParams(
        dimension_semantics=semantics,
        vmem_limit_bytes=int(min(max(need, 32 << 20), 48 << 20)),
    )


# ---------------------------------------------------------------------------
# Kernel 1: M-tiled matmul + bias + activation (bf16 MXU, f32 epilogue)
# Used for the label Linear and for conv1 (im2col patches).
# ---------------------------------------------------------------------------
def matmul_bias_act(x, w, b, act=None, out_dtype=jnp.float32, tm=2048):
    """y = act(x @ w + b).  x, w must already be bf16; rows tiled, "parallel"."""
    M, K = x.shape
    N = w.shape[1]
    tm = min(tm, _round_up(M, 8))
    Mp = _round_up(M, tm)
    if Mp != M:
        x = jnp.pad(x, ((0, Mp - M), (0, 0)))

    def kernel(x_ref, w_ref, b_ref, o_ref):
        y = jnp.dot(x_ref[...], w_ref[...], preferred_element_type=jnp.float32)
        y = y + b_ref[...]                       # bias / activation in f32 (VPU)
        if act == "leaky_relu":
            y = jnp.where(y > 0, y, 0.2 * y)
        o_ref[...] = y.astype(o_ref.dtype)

    grid_spec = pltpu.PrefetchScalarGridSpec(
        num_scalar_prefetch=0,
        grid=(Mp // tm,),
        in_specs=[
            pl.BlockSpec((tm, K), lambda i: (i, 0)),
            pl.BlockSpec((K, N), lambda i: (0, 0)),   # weights stay resident
            pl.BlockSpec((1, N), lambda i: (0, 0)),
        ],
        out_specs=pl.BlockSpec((tm, N), lambda i: (i, 0)),
    )
    tile_bytes = tm * K * 2 + K * N * 2 + N * 4 + tm * N * jnp.dtype(out_dtype).itemsize
    out = pl.pallas_call(
        kernel,
        out_shape=jax.ShapeDtypeStruct((Mp, N), out_dtype),
        grid_spec=grid_spec,
        compiler_params=_cparams(("parallel",), tile_bytes),
    )(x, w, b)
    return out[:M] if Mp != M else out


# ---------------------------------------------------------------------------
# Kernel 2: conv2 via in-kernel space-to-depth taps + per-block BN partial sums
# ---------------------------------------------------------------------------
def conv2_bn_stats(xs, w2, b2, mask, *, G, R, Ws):
    """Conv2d(64,128,4,2,1) as four unit-stride tap matmuls (K=256) per image.

    xs:   (Bp, R_in, 4*C1) bf16 -- padded space-to-depth of the conv1 output.
    w2:   (4, 4*C1, C2) bf16    -- tap-major repack of the conv weight.
    mask: (Bp, R, 1) f32        -- 1.0 on real output rows / real images, else 0.
    Returns y2 (Bp, R, C2) bf16 with row p = i*Ws+j (j==W2 and p>=Pp rows are junk
    but finite and always masked downstream) plus per-grid-block BN partial sums.
    """
    Bp, R_in, Ks = xs.shape
    C2 = w2.shape[-1]
    nb = Bp // G
    starts = (0, 1, Ws, Ws + 1)   # (dh, dw) taps -> row offset dh*Ws + dw

    def kernel(x_ref, w_ref, b_ref, m_ref, y_ref, s_ref, ss_ref):
        s_acc = jnp.zeros((1, C2), jnp.float32)
        ss_acc = jnp.zeros((1, C2), jnp.float32)
        for g in range(G):                         # unrolled, G <= 8
            xg = x_ref[g]                          # (R_in, Ks) bf16
            # Per-image f32 accumulator (bounded: R*C2*4 bytes, feedback item 8).
            acc = jnp.zeros((R, C2), jnp.float32)
            for t, st in enumerate(starts):        # 4 taps, each a K=256 dot
                acc = acc + jnp.dot(xg[st:st + R, :], w_ref[t],
                                    preferred_element_type=jnp.float32)
            y = acc + b_ref[...]
            y_ref[g] = y.astype(y_ref.dtype)
            ym = y * m_ref[g]                      # mask pad rows / pad images
            s_acc = s_acc + jnp.sum(ym, axis=0, keepdims=True)
            ss_acc = ss_acc + jnp.sum(ym * ym, axis=0, keepdims=True)
        s_ref[...] = s_acc.reshape(1, 1, C2)       # per-block partial sums
        ss_ref[...] = ss_acc.reshape(1, 1, C2)

    out_shape = (
        jax.ShapeDtypeStruct((Bp, R, C2), jnp.bfloat16),
        jax.ShapeDtypeStruct((nb, 1, C2), jnp.float32),
        jax.ShapeDtypeStruct((nb, 1, C2), jnp.float32),
    )
    grid_spec = pltpu.PrefetchScalarGridSpec(
        num_scalar_prefetch=0,
        grid=(nb,),
        in_specs=[
            pl.BlockSpec((G, R_in, Ks), lambda b: (b, 0, 0)),
            pl.BlockSpec((4, Ks, C2), lambda b: (0, 0, 0)),
            pl.BlockSpec((1, C2), lambda b: (0, 0)),
            pl.BlockSpec((G, R, 1), lambda b: (b, 0, 0)),
        ],
        out_specs=[
            pl.BlockSpec((G, R, C2), lambda b: (b, 0, 0)),
            pl.BlockSpec((1, 1, C2), lambda b: (b, 0, 0)),   # partials, no accumulation
            pl.BlockSpec((1, 1, C2), lambda b: (b, 0, 0)),
        ],
    )
    tile_bytes = (G * R_in * Ks * 2 + 4 * Ks * C2 * 2 + C2 * 4 + G * R * 4
                  + G * R * C2 * 2 + 2 * C2 * 4 + R * C2 * 4)
    # Partial BN sums per block => batch axis is truly "parallel" (2 TCs on v7x).
    return pl.pallas_call(
        kernel,
        out_shape=out_shape,
        grid_spec=grid_spec,
        compiler_params=_cparams(("parallel",), tile_bytes),
    )(xs, w2, b2, mask)


# ---------------------------------------------------------------------------
# Kernel 3: fused BatchNorm (batch stats) + LeakyReLU + Linear(->1) + Sigmoid
# ---------------------------------------------------------------------------
def bn_leaky_fc_sigmoid(y2, s_part, ss_part, gamma, beta, w_fc, b_fc, *, count, G,
                        eps=1e-5):
    Bp, R, C = y2.shape
    nb_b = Bp // G
    nb_s = s_part.shape[0]
    inv_n = 1.0 / float(count)

    def kernel(y_ref, s_ref, ss_ref, g_ref, bt_ref, w_ref, bf_ref, o_ref):
        mean = jnp.sum(s_ref[...], axis=0) * inv_n                  # (1, C)
        var = jnp.sum(ss_ref[...], axis=0) * inv_n - mean * mean    # biased (training BN)
        scale = jax.lax.rsqrt(var + eps) * g_ref[...]
        shift = bt_ref[...] - mean * scale
        y = y_ref[...].astype(jnp.float32) * scale + shift          # (G, R, C)
        y = jnp.where(y > 0, y, 0.2 * y)
        w = w_ref[...].astype(jnp.float32)                          # (R, C), zero on pad rows
        v = jnp.sum(y * w[None], axis=2, keepdims=True)             # (G, R, 1)
        v = jnp.sum(v, axis=1, keepdims=True) + bf_ref[...]         # (G, 1, 1)
        o_ref[...] = 1.0 / (1.0 + jnp.exp(-v))

    grid_spec = pltpu.PrefetchScalarGridSpec(
        num_scalar_prefetch=0,
        grid=(nb_b,),
        in_specs=[
            pl.BlockSpec((G, R, C), lambda b: (b, 0, 0)),
            pl.BlockSpec((nb_s, 1, C), lambda b: (0, 0, 0)),
            pl.BlockSpec((nb_s, 1, C), lambda b: (0, 0, 0)),
            pl.BlockSpec((1, C), lambda b: (0, 0)),
            pl.BlockSpec((1, C), lambda b: (0, 0)),
            pl.BlockSpec((R, C), lambda b: (0, 0)),
            pl.BlockSpec((1, 1), lambda b: (0, 0)),
        ],
        out_specs=pl.BlockSpec((G, 1, 1), lambda b: (b, 0, 0)),
    )
    tile_bytes = G * R * C * 2 + G * R * C * 4 + 2 * nb_s * C * 4 + 2 * C * 4 + R * C * 2 + 8
    return pl.pallas_call(
        kernel,
        out_shape=jax.ShapeDtypeStruct((Bp, 1, 1), jnp.float32),
        grid_spec=grid_spec,
        compiler_params=_cparams(("parallel",), tile_bytes),
    )(y2, s_part, ss_part, gamma, beta, w_fc, b_fc)


# ---------------------------------------------------------------------------
# Glue: im2col for conv1 only (2 input channels, bf16) -- pure layout work
# ---------------------------------------------------------------------------
def im2col(x, k=4, s=2, p=1):
    """x: (B, H, W, C) NHWC -> patches (B*Ho*Wo, k*k*C), patch order (kh, kw, c)."""
    B, H, W, C = x.shape
    xp = jnp.pad(x, ((0, 0), (p, p), (p, p), (0, 0)))
    Ho = (H + 2 * p - k) // s + 1
    Wo = (W + 2 * p - k) // s + 1
    cols = []
    for kh in range(k):
        for kw in range(k):
            cols.append(xp[:, kh:kh + Ho * s:s, kw:kw + Wo * s:s, :])
    pat = jnp.stack(cols, axis=3)                    # (B, Ho, Wo, k*k, C)
    return pat.reshape(B * Ho * Wo, k * k * C), Ho, Wo


# ---------------------------------------------------------------------------
# Discriminator forward
# ---------------------------------------------------------------------------
def discriminator_forward(params, img, c_label, image_size):
    """img: (B, 1, H, W) NCHW (like PyTorch); c_label: (B, n_classes)."""
    B = img.shape[0]
    H = W = image_size
    H1 = W1 = image_size // 2
    H2 = W2 = image_size // 4
    Ws = W2 + 1
    Pp = H2 * Ws
    R = _round_up(Pp, 8)                 # output rows per image (padded to sublanes)
    R_in = _round_up(R + Ws + 1, 8)      # input rows per image so all tap slices fit
    C1, C2 = 64, 128

    G = min(8, B)                        # images per grid step (batch blocking)
    Bp = _round_up(B, G)

    # 1) label projection: Linear(n_classes -> H*W) as a lane-dense bf16 matmul.
    Kp = params["w_lab"].shape[0]
    c_pad = jnp.pad(c_label, ((0, 0), (0, Kp - c_label.shape[1]))).astype(jnp.bfloat16)
    lab = matmul_bias_act(c_pad, params["w_lab"], params["b_lab"],
                          act=None, out_dtype=jnp.bfloat16)          # (B, H*W)
    lab = lab.reshape(B, H, W)

    # 2) channel concat in bf16 (NCHW cat dim=1 == NHWC cat on the last axis).
    x = jnp.stack([img[:, 0].astype(jnp.bfloat16), lab], axis=-1)    # (B, H, W, 2)

    # 3) Conv2d(2,64,4,2,1)+LeakyReLU: bf16 im2col + MXU matmul with N padded to 128
    #    so the output stores are lane-dense; the pad channels are sliced off below.
    p1, _, _ = im2col(x, k=4, s=2, p=1)                              # (B*H1*W1, 32) bf16
    y1 = matmul_bias_act(p1, params["w_conv1"], params["b_conv1"],
                         act="leaky_relu", out_dtype=jnp.bfloat16)   # (M, 128)
    y1 = y1.reshape(B, H1, W1, 128)[..., :C1]                        # drop pad channels

    # 4) Conv2d(64,128,4,2,1) without a 16x im2col: zero-pad (conv halo + extra rows),
    #    space-to-depth by 2 so the four (dh,dw) taps are row windows in the kernel.
    # TODO(synk): fuse this pad/space-to-depth layout into conv1's output spec to
    # save one HBM round trip of y1.
    y1 = jnp.pad(y1, ((0, Bp - B), (1, 3), (1, 1), (0, 0)))          # (Bp, H1+4, W1+2, C1)
    Rows = (H2 + 2) * Ws
    xs = (y1.reshape(Bp, H2 + 2, 2, Ws, 2, C1)
            .transpose(0, 1, 3, 2, 4, 5)
            .reshape(Bp, Rows, 4 * C1))                              # (Bp, Rows, 256) bf16
    if R_in <= Rows:
        xs = xs[:, :R_in]
    else:
        xs = jnp.pad(xs, ((0, 0), (0, R_in - Rows), (0, 0)))

    p_idx = jnp.arange(R)
    row_ok = (p_idx < Pp) & ((p_idx % Ws) < W2)                      # real output rows
    b_ok = jnp.arange(Bp) < B                                        # real images
    mask = (b_ok[:, None] & row_ok[None, :]).astype(jnp.float32)[:, :, None]

    y2, s_part, ss_part = conv2_bn_stats(xs, params["w_conv2"], params["b_conv2"],
                                         mask, G=G, R=R, Ws=Ws)

    # 5) Fused BatchNorm2d(128) (batch stats) + LeakyReLU + Flatten + Linear + Sigmoid.
    out = bn_leaky_fc_sigmoid(y2, s_part, ss_part,
                              params["bn_gamma"], params["bn_beta"],
                              params["w_fc"], params["b_fc"],
                              count=B * H2 * W2, G=G)
    return out.reshape(Bp, 1)[:B]


# ---------------------------------------------------------------------------
# Parameters: PyTorch-layout weights, converted once to the kernel layouts
# ---------------------------------------------------------------------------
def init_torch_params(key, n_classes, image_size):
    ks = jax.random.split(key, 10)
    H = W = image_size
    H2 = W2 = image_size // 4
    C1, C2 = 64, 128
    f = jax.random.normal
    return {
        "w_lab": 0.05 * f(ks[0], (H * W, n_classes), jnp.float32),   # (out, in)
        "b_lab": 0.05 * f(ks[1], (H * W,), jnp.float32),
        "w1": 0.05 * f(ks[2], (C1, 2, 4, 4), jnp.float32),           # (O, I, kh, kw)
        "b1": 0.05 * f(ks[3], (C1,), jnp.float32),
        "w2": 0.05 * f(ks[4], (C2, C1, 4, 4), jnp.float32),
        "b2": 0.05 * f(ks[5], (C2,), jnp.float32),
        "gamma": 1.0 + 0.05 * f(ks[6], (C2,), jnp.float32),
        "beta": 0.05 * f(ks[7], (C2,), jnp.float32),
        "w_fc": 0.05 * f(ks[8], (1, C2 * H2 * W2), jnp.float32),     # NCHW flatten order
        "b_fc": 0.05 * f(ks[9], (1,), jnp.float32),
    }


def pack_params(tp, n_classes, image_size):
    H = W = image_size
    H2 = W2 = image_size // 4
    Ws = W2 + 1
    Pp = H2 * Ws
    R = _round_up(Pp, 8)
    C1, C2 = 64, 128
    Kp = _round_up(n_classes, 8)

    # label Linear: y = x @ W^T + b ; pad the (tiny) K dim to a sublane multiple.
    w_lab = jnp.pad(jnp.transpose(tp["w_lab"], (1, 0)),
                    ((0, Kp - n_classes), (0, 0))).astype(jnp.bfloat16)   # (Kp, H*W)
    b_lab = tp["b_lab"].reshape(1, H * W)

    # conv1 -> im2col patch order (kh, kw, cin) x cout, N zero-padded 64 -> 128.
    w1 = jnp.transpose(tp["w1"], (2, 3, 1, 0)).reshape(4 * 4 * 2, C1)
    w1 = jnp.pad(w1, ((0, 0), (0, 128 - C1))).astype(jnp.bfloat16)        # (32, 128)
    b1 = jnp.pad(tp["b1"], (0, 128 - C1)).reshape(1, 128)

    # conv2 -> space-to-depth tap layout: tap = dh*2+dw, row = rh*2*C1 + rw*C1 + cin.
    wt = jnp.transpose(tp["w2"], (2, 3, 1, 0))                            # (kh, kw, ci, co)
    w2 = (wt.reshape(2, 2, 2, 2, C1, C2)                                  # (dh, rh, dw, rw, ci, co)
            .transpose(0, 2, 1, 3, 4, 5)                                  # (dh, dw, rh, rw, ci, co)
            .reshape(4, 4 * C1, C2)).astype(jnp.bfloat16)
    b2 = tp["b2"].reshape(1, C2)

    # fc -> pre-permuted from NCHW flatten order to y2's padded NHWC row layout; bf16.
    wfc = jnp.transpose(tp["w_fc"].reshape(C2, H2, W2), (1, 2, 0))        # (H2, W2, C2)
    wfc = jnp.pad(wfc, ((0, 0), (0, 1), (0, 0))).reshape(Pp, C2)          # zero j==W2 rows
    wfc = jnp.pad(wfc, ((0, R - Pp), (0, 0))).astype(jnp.bfloat16)        # (R, C2)

    return {
        "w_lab": w_lab, "b_lab": b_lab,
        "w_conv1": w1, "b_conv1": b1,
        "w_conv2": w2, "b_conv2": b2,
        "bn_gamma": tp["gamma"].reshape(1, C2),
        "bn_beta": tp["beta"].reshape(1, C2),
        "w_fc": wfc, "b_fc": tp["b_fc"].reshape(1, 1),
    }


# ---------------------------------------------------------------------------
# Pure-JAX reference (f32, PyTorch semantics) for a numerical check
# ---------------------------------------------------------------------------
def reference_forward(tp, img, c_label, image_size):
    B = img.shape[0]
    lab = c_label @ tp["w_lab"].T + tp["b_lab"]
    lab = lab.reshape(B, 1, image_size, image_size)
    x = jnp.concatenate([img, lab], axis=1)
    dn = ("NCHW", "OIHW", "NCHW")
    y = jax.lax.conv_general_dilated(x, tp["w1"], (2, 2), ((1, 1), (1, 1)),
                                     dimension_numbers=dn) + tp["b1"][None, :, None, None]
    y = jnp.where(y > 0, y, 0.2 * y)
    y = jax.lax.conv_general_dilated(y, tp["w2"], (2, 2), ((1, 1), (1, 1)),
                                     dimension_numbers=dn) + tp["b2"][None, :, None, None]
    mean = jnp.mean(y, axis=(0, 2, 3), keepdims=True)
    var = jnp.mean((y - mean) ** 2, axis=(0, 2, 3), keepdims=True)
    y = (y - mean) * jax.lax.rsqrt(var + 1e-5) * tp["gamma"][None, :, None, None] \
        + tp["beta"][None, :, None, None]
    y = jnp.where(y > 0, y, 0.2 * y)
    v = y.reshape(B, -1) @ tp["w_fc"].T + tp["b_fc"]
    return jax.nn.sigmoid(v)


if __name__ == "__main__":
    B, n_classes, image_size = 2, 4, 16

    key = jax.random.PRNGKey(0)
    k_img, k_lab, k_par = jax.random.split(key, 3)

    img = jax.random.normal(k_img, (B, 1, image_size, image_size), jnp.float32)
    labels = jax.random.randint(k_lab, (B,), 0, n_classes)
    c_label = jax.nn.one_hot(labels, n_classes, dtype=jnp.float32)   # (B, n_classes)

    tp = init_torch_params(k_par, n_classes, image_size)
    params = pack_params(tp, n_classes, image_size)

    fwd = jax.jit(functools.partial(discriminator_forward, image_size=image_size))
    out = jax.block_until_ready(fwd(params, img, c_label))

    assert out.shape == (B, 1), out.shape
    assert bool(jnp.all(jnp.isfinite(out)))
    assert bool(jnp.all((out >= 0.0) & (out <= 1.0)))

    ref = reference_forward(tp, img, c_label, image_size)
    err = float(jnp.max(jnp.abs(out - ref)))
    assert err < 5e-2, f"max abs error vs reference: {err}"
    print("KERNEL_OK")
</pallas_src>

<mosaic_0001>
module attributes {stable_mosaic.version = 11 : i64} {
  func.func @kernel(%arg0: i32, %arg1: memref<8x8xbf16, #tpu.memory_space<vmem>>, %arg2: memref<8x256xbf16, #tpu.memory_space<vmem>>, %arg3: memref<1x256xf32, #tpu.memory_space<vmem>>, %arg4: memref<8x256xbf16, #tpu.memory_space<vmem>>) attributes {dimension_semantics = [#tpu.dimension_semantics<parallel>], iteration_bounds = array<i64: 1>, scalar_prefetch = 0 : i64, scratch_operands = 0 : i64, tpu.core_type = #tpu.core_type<tc>, window_params = [{transform_indices = @transform_0, window_bounds = array<i64: 8, 8>}, {pipeline_mode = #tpu.pipeline_mode<synchronous>, transform_indices = @transform_1, window_bounds = array<i64: 8, 256>}, {pipeline_mode = #tpu.pipeline_mode<synchronous>, transform_indices = @transform_2, window_bounds = array<i64: 1, 256>}, {transform_indices = @transform_3, window_bounds = array<i64: 8, 256>}]} {
    %c0 = arith.constant 0 : index
    %c0_0 = arith.constant 0 : index
    %0 = vector.load %arg1[%c0, %c0_0] : memref<8x8xbf16, #tpu.memory_space<vmem>>, vector<8x8xbf16>
    %c0_1 = arith.constant 0 : index
    %c0_2 = arith.constant 0 : index
    %1 = vector.load %arg2[%c0_1, %c0_2] : memref<8x256xbf16, #tpu.memory_space<vmem>>, vector<8x256xbf16>
    %cst = arith.constant dense<0.000000e+00> : vector<8x256xf32>
    %2 = tpu.matmul %0, %1, %cst {dimension_numbers = #tpu.dot_dimension_numbers<[1], [0], [0], [1], [0, 0, 1, 1], [], []>} : vector<8x8xbf16>, vector<8x256xbf16>, vector<8x256xf32> -> vector<8x256xf32>
    %c0_3 = arith.constant 0 : index
    %c0_4 = arith.constant 0 : index
    %3 = vector.load %arg3[%c0_3, %c0_4] : memref<1x256xf32, #tpu.memory_space<vmem>>, vector<1x256xf32>
    %4 = vector.broadcast %3 : vector<1x256xf32> to vector<8x256xf32>
    %5 = arith.addf %2, %4 : vector<8x256xf32>
    %6 = arith.truncf %5 : vector<8x256xf32> to vector<8x256xbf16>
    %c0_5 = arith.constant 0 : index
    %c0_6 = arith.constant 0 : index
    %7 = vector.load %arg4[%c0_5, %c0_6] : memref<8x256xbf16, #tpu.memory_space<vmem>>, vector<8x256xbf16>
    tpu.vector_store %arg4[%c0_5, %c0_6], %6 {strides = array<i32>} : memref<8x256xbf16, #tpu.memory_space<vmem>>, vector<8x256xbf16>,
    return
  }
  func.func @transform_0(%arg0: i32) -> (i32, i32) {
    %c0_i32 = arith.constant 0 : i32
    %c0_i32_0 = arith.constant 0 : i32
    return %arg0, %c0_i32 : i32, i32
  }
  func.func @transform_1(%arg0: i32) -> (i32, i32) {
    %c0_i32 = arith.constant 0 : i32
    %c0_i32_0 = arith.constant 0 : i32
    %c0_i32_1 = arith.constant 0 : i32
    return %c0_i32, %c0_i32_0 : i32, i32
  }
  func.func @transform_2(%arg0: i32) -> (i32, i32) {
    %c0_i32 = arith.constant 0 : i32
    %c0_i32_0 = arith.constant 0 : i32
    %c0_i32_1 = arith.constant 0 : i32
    return %c0_i32, %c0_i32_0 : i32, i32
  }
  func.func @transform_3(%arg0: i32) -> (i32, i32) {
    %c0_i32 = arith.constant 0 : i32
    %c0_i32_0 = arith.constant 0 : i32
    return %arg0, %c0_i32 : i32, i32
  }
}

module attributes {stable_mosaic.version = 11 : i64} {
  func.func @kernel(%arg0: i32, %arg1: memref<128x32xbf16, #tpu.memory_space<vmem>>, %arg2: memref<32x128xbf16, #tpu.memory_space<vmem>>, %arg3: memref<1x128xf32, #tpu.memory_space<vmem>>, %arg4: memref<128x128xbf16, #tpu.memory_space<vmem>>) attributes {dimension_semantics = [#tpu.dimension_semantics<parallel>], iteration_bounds = array<i64: 1>, scalar_prefetch = 0 : i64, scratch_operands = 0 : i64, tpu.core_type = #tpu.core_type<tc>, window_params = [{transform_indices = @transform_0, window_bounds = array<i64: 128, 32>}, {pipeline_mode = #tpu.pipeline_mode<synchronous>, transform_indices = @transform_1, window_bounds = array<i64: 32, 128>}, {pipeline_mode = #tpu.pipeline_mode<synchronous>, transform_indices = @transform_2, window_bounds = array<i64: 1, 128>}, {transform_indices = @transform_3, window_bounds = array<i64: 128, 128>}]} {
    %c0 = arith.constant 0 : index
    %c0_0 = arith.constant 0 : index
    %0 = vector.load %arg1[%c0, %c0_0] : memref<128x32xbf16, #tpu.memory_space<vmem>>, vector<128x32xbf16>
    %c0_1 = arith.constant 0 : index
    %c0_2 = arith.constant 0 : index
    %1 = vector.load %arg2[%c0_1, %c0_2] : memref<32x128xbf16, #tpu.memory_space<vmem>>, vector<32x128xbf16>
    %cst = arith.constant dense<0.000000e+00> : vector<128x128xf32>
    %2 = tpu.matmul %0, %1, %cst {dimension_numbers = #tpu.dot_dimension_numbers<[1], [0], [0], [1], [0, 0, 1, 1], [], []>} : vector<128x32xbf16>, vector<32x128xbf16>, vector<128x128xf32> -> vector<128x128xf32>
    %c0_3 = arith.constant 0 : index
    %c0_4 = arith.constant 0 : index
    %3 = vector.load %arg3[%c0_3, %c0_4] : memref<1x128xf32, #tpu.memory_space<vmem>>, vector<1x128xf32>
    %4 = vector.broadcast %3 : vector<1x128xf32> to vector<128x128xf32>
    %5 = arith.addf %2, %4 : vector<128x128xf32>
    %cst_5 = arith.constant 0.000000e+00 : f32
    %6 = vector.broadcast %cst_5 : f32 to vector<128x128xf32>
    %7 = arith.cmpf ogt, %5, %6 : vector<128x128xf32>
    %cst_6 = arith.constant 2.000000e-01 : f32
    %8 = vector.broadcast %cst_6 : f32 to vector<128x128xf32>
    %9 = arith.mulf %8, %5 : vector<128x128xf32>
    %10 = arith.select %7, %5, %9 : vector<128x128xi1>, vector<128x128xf32>
    %11 = arith.truncf %10 : vector<128x128xf32> to vector<128x128xbf16>
    %c0_7 = arith.constant 0 : index
    %c0_8 = arith.constant 0 : index
    %12 = vector.load %arg4[%c0_7, %c0_8] : memref<128x128xbf16, #tpu.memory_space<vmem>>, vector<128x128xbf16>
    tpu.vector_store %arg4[%c0_7, %c0_8], %11 {strides = array<i32>} : memref<128x128xbf16, #tpu.memory_space<vmem>>, vector<128x128xbf16>,
    return
  }
  func.func @transform_0(%arg0: i32) -> (i32, i32) {
    %c0_i32 = arith.constant 0 : i32
    %c0_i32_0 = arith.constant 0 : i32
    return %arg0, %c0_i32 : i32, i32
  }
  func.func @transform_1(%arg0: i32) -> (i32, i32) {
    %c0_i32 = arith.constant 0 : i32
    %c0_i32_0 = arith.constant 0 : i32
    %c0_i32_1 = arith.constant 0 : i32
    return %c0_i32, %c0_i32_0 : i32, i32
  }
  func.func @transform_2(%arg0: i32) -> (i32, i32) {
    %c0_i32 = arith.constant 0 : i32
    %c0_i32_0 = arith.constant 0 : i32
    %c0_i32_1 = arith.constant 0 : i32
    return %c0_i32, %c0_i32_0 : i32, i32
  }
  func.func @transform_3(%arg0: i32) -> (i32, i32) {
    %c0_i32 = arith.constant 0 : i32
    %c0_i32_0 = arith.constant 0 : i32
    return %arg0, %c0_i32 : i32, i32
  }
}

module attributes {stable_mosaic.version = 11 : i64} {
  func.func @kernel(%arg0: i32, %arg1: memref<2x32x256xbf16, #tpu.memory_space<vmem>>, %arg2: memref<4x256x128xbf16, #tpu.memory_space<vmem>>, %arg3: memref<1x128xf32, #tpu.memory_space<vmem>>, %arg4: memref<2x24x1xf32, #tpu.memory_space<vmem>>, %arg5: memref<2x24x128xbf16, #tpu.memory_space<vmem>>, %arg6: memref<1x1x128xf32, #tpu.memory_space<vmem>>, %arg7: memref<1x1x128xf32, #tpu.memory_space<vmem>>) attributes {dimension_semantics = [#tpu.dimension_semantics<parallel>], iteration_bounds = array<i64: 1>, scalar_prefetch = 0 : i64, scratch_operands = 0 : i64, tpu.core_type = #tpu.core_type<tc>, window_params = [{transform_indices = @transform_0, window_bounds = array<i64: 2, 32, 256>}, {pipeline_mode = #tpu.pipeline_mode<synchronous>, transform_indices = @transform_1, window_bounds = array<i64: 4, 256, 128>}, {pipeline_mode = #tpu.pipeline_mode<synchronous>, transform_indices = @transform_2, window_bounds = array<i64: 1, 128>}, {transform_indices = @transform_3, window_bounds = array<i64: 2, 24, 1>}, {transform_indices = @transform_4, window_bounds = array<i64: 2, 24, 128>}, {transform_indices = @transform_5, window_bounds = array<i64: 1, 1, 128>}, {transform_indices = @transform_6, window_bounds = array<i64: 1, 1, 128>}]} {
    %cst = arith.constant 0.000000e+00 : f32
    %0 = vector.broadcast %cst : f32 to vector<1x128xf32>
    %cst_0 = arith.constant 0.000000e+00 : f32
    %1 = vector.broadcast %cst_0 : f32 to vector<1x128xf32>
    %c0 = arith.constant 0 : index
    %c0_1 = arith.constant 0 : index
    %c0_2 = arith.constant 0 : index
    %2 = vector.load %arg1[%c0, %c0_1, %c0_2] : memref<2x32x256xbf16, #tpu.memory_space<vmem>>, vector<1x32x256xbf16>
    %3 = vector.shape_cast %2 : vector<1x32x256xbf16> to vector<32x256xbf16>
    %cst_3 = arith.constant 0.000000e+00 : f32
    %4 = vector.broadcast %cst_3 : f32 to vector<24x128xf32>
    %5 = vector.extract_strided_slice %3 {offsets = [0, 0], sizes = [24, 256], strides = [1, 1]} : vector<32x256xbf16> to vector<24x256xbf16>
    %c0_4 = arith.constant 0 : index
    %c0_5 = arith.constant 0 : index
    %c0_6 = arith.constant 0 : index
    %6 = vector.load %arg2[%c0_4, %c0_5, %c0_6] : memref<4x256x128xbf16, #tpu.memory_space<vmem>>, vector<1x256x128xbf16>
    %7 = vector.shape_cast %6 : vector<1x256x128xbf16> to vector<256x128xbf16>
    %cst_7 = arith.constant dense<0.000000e+00> : vector<24x128xf32>
    %8 = tpu.matmul %5, %7, %cst_7 {dimension_numbers = #tpu.dot_dimension_numbers<[1], [0], [0], [1], [0, 0, 1, 1], [], []>} : vector<24x256xbf16>, vector<256x128xbf16>, vector<24x128xf32> -> vector<24x128xf32>
    %9 = arith.addf %4, %8 : vector<24x128xf32>
    %10 = vector.extract_strided_slice %3 {offsets = [1, 0], sizes = [24, 256], strides = [1, 1]} : vector<32x256xbf16> to vector<24x256xbf16>
    %c1 = arith.constant 1 : index
    %c0_8 = arith.constant 0 : index
    %c0_9 = arith.constant 0 : index
    %11 = vector.load %arg2[%c1, %c0_8, %c0_9] : memref<4x256x128xbf16, #tpu.memory_space<vmem>>, vector<1x256x128xbf16>
    %12 = vector.shape_cast %11 : vector<1x256x128xbf16> to vector<256x128xbf16>
    %cst_10 = arith.constant dense<0.000000e+00> : vector<24x128xf32>
    %13 = tpu.matmul %10, %12, %cst_10 {dimension_numbers = #tpu.dot_dimension_numbers<[1], [0], [0], [1], [0, 0, 1, 1], [], []>} : vector<24x256xbf16>, vector<256x128xbf16>, vector<24x128xf32> -> vector<24x128xf32>
    %14 = arith.addf %9, %13 : vector<24x128xf32>
    %15 = vector.extract_strided_slice %3 {offsets = [5, 0], sizes = [24, 256], strides = [1, 1]} : vector<32x256xbf16> to vector<24x256xbf16>
    %c2 = arith.constant 2 : index
    %c0_11 = arith.constant 0 : index
    %c0_12 = arith.constant 0 : index
    %16 = vector.load %arg2[%c2, %c0_11, %c0_12] : memref<4x256x128xbf16, #tpu.memory_space<vmem>>, vector<1x256x128xbf16>
    %17 = vector.shape_cast %16 : vector<1x256x128xbf16> to vector<256x128xbf16>
    %cst_13 = arith.constant dense<0.000000e+00> : vector<24x128xf32>
    %18 = tpu.matmul %15, %17, %cst_13 {dimension_numbers = #tpu.dot_dimension_numbers<[1], [0], [0], [1], [0, 0, 1, 1], [], []>} : vector<24x256xbf16>, vector<256x128xbf16>, vector<24x128xf32> -> vector<24x128xf32>
    %19 = arith.addf %14, %18 : vector<24x128xf32>
    %20 = vector.extract_strided_slice %3 {offsets = [6, 0], sizes = [24, 256], strides = [1, 1]} : vector<32x256xbf16> to vector<24x256xbf16>
    %c3 = arith.constant 3 : index
    %c0_14 = arith.constant 0 : index
    %c0_15 = arith.constant 0 : index
    %21 = vector.load %arg2[%c3, %c0_14, %c0_15] : memref<4x256x128xbf16, #tpu.memory_space<vmem>>, vector<1x256x128xbf16>
    %22 = vector.shape_cast %21 : vector<1x256x128xbf16> to vector<256x128xbf16>
    %cst_16 = arith.constant dense<0.000000e+00> : vector<24x128xf32>
    %23 = tpu.matmul %20, %22, %cst_16 {dimension_numbers = #tpu.dot_dimension_numbers<[1], [0], [0], [1], [0, 0, 1, 1], [], []>} : vector<24x256xbf16>, vector<256x128xbf16>, vector<24x128xf32> -> vector<24x128xf32>
    %24 = arith.addf %19, %23 : vector<24x128xf32>
    %c0_17 = arith.constant 0 : index
    %c0_18 = arith.constant 0 : index
    %25 = vector.load %arg3[%c0_17, %c0_18] : memref<1x128xf32, #tpu.memory_space<vmem>>, vector<1x128xf32>
    %26 = vector.broadcast %25 : vector<1x128xf32> to vector<24x128xf32>
    %27 = arith.addf %24, %26 : vector<24x128xf32>
    %28 = arith.truncf %27 : vector<24x128xf32> to vector<24x128xbf16>
    %c0_19 = arith.constant 0 : index
    %c0_20 = arith.constant 0 : index
    %c0_21 = arith.constant 0 : index
    %29 = vector.load %arg5[%c0_19, %c0_20, %c0_21] : memref<2x24x128xbf16, #tpu.memory_space<vmem>>, vector<1x24x128xbf16>
    %30 = vector.shape_cast %29 : vector<1x24x128xbf16> to vector<24x128xbf16>
    %31 = vector.shape_cast %28 : vector<24x128xbf16> to vector<1x24x128xbf16>
    tpu.vector_store %arg5[%c0_19, %c0_20, %c0_21], %31 {strides = array<i32>} : memref<2x24x128xbf16, #tpu.memory_space<vmem>>, vector<1x24x128xbf16>,
    %c0_22 = arith.constant 0 : index
    %c0_23 = arith.constant 0 : index
    %c0_24 = arith.constant 0 : index
    %32 = vector.load %arg4[%c0_22, %c0_23, %c0_24] : memref<2x24x1xf32, #tpu.memory_space<vmem>>, vector<1x24x1xf32>
    %33 = vector.shape_cast %32 : vector<1x24x1xf32> to vector<24x1xf32>
    %34 = vector.broadcast %33 : vector<24x1xf32> to vector<24x128xf32>
    %35 = arith.mulf %27, %34 : vector<24x128xf32>
    %cst_25 = arith.constant dense<0.000000e+00> : vector<128xf32>
    %36 = vector.multi_reduction <add>, %35, %cst_25 [0] : vector<24x128xf32> to vector<128xf32>
    %37 = vector.shape_cast %36 : vector<128xf32> to vector<1x128xf32>
    %38 = arith.addf %0, %37 : vector<1x128xf32>
    %39 = arith.mulf %35, %35 : vector<24x128xf32>
    %cst_26 = arith.constant dense<0.000000e+00> : vector<128xf32>
    %40 = vector.multi_reduction <add>, %39, %cst_26 [0] : vector<24x128xf32> to vector<128xf32>
    %41 = vector.shape_cast %40 : vector<128xf32> to vector<1x128xf32>
    %42 = arith.addf %1, %41 : vector<1x128xf32>
    %c1_27 = arith.constant 1 : index
    %c0_28 = arith.constant 0 : index
    %c0_29 = arith.constant 0 : index
    %43 = vector.load %arg1[%c1_27, %c0_28, %c0_29] : memref<2x32x256xbf16, #tpu.memory_space<vmem>>, vector<1x32x256xbf16>
    %44 = vector.shape_cast %43 : vector<1x32x256xbf16> to vector<32x256xbf16>
    %cst_30 = arith.constant 0.000000e+00 : f32
    %45 = vector.broadcast %cst_30 : f32 to vector<24x128xf32>
    %46 = vector.extract_strided_slice %44 {offsets = [0, 0], sizes = [24, 256], strides = [1, 1]} : vector<32x256xbf16> to vector<24x256xbf16>
    %c0_31 = arith.constant 0 : index
    %c0_32 = arith.constant 0 : index
    %c0_33 = arith.constant 0 : index
    %47 = vector.load %arg2[%c0_31, %c0_32, %c0_33] : memref<4x256x128xbf16, #tpu.memory_space<vmem>>, vector<1x256x128xbf16>
    %48 = vector.shape_cast %47 : vector<1x256x128xbf16> to vector<256x128xbf16>
    %cst_34 = arith.constant dense<0.000000e+00> : vector<24x128xf32>
    %49 = tpu.matmul %46, %48, %cst_34 {dimension_numbers = #tpu.dot_dimension_numbers<[1], [0], [0], [1], [0, 0, 1, 1], [], []>} : vector<24x256xbf16>, vector<256x128xbf16>, vector<24x128xf32> -> vector<24x128xf32>
    %50 = arith.addf %45, %49 : vector<24x128xf32>
    %51 = vector.extract_strided_slice %44 {offsets = [1, 0], sizes = [24, 256], strides = [1, 1]} : vector<32x256xbf16> to vector<24x256xbf16>
    %c1_35 = arith.constant 1 : index
    %c0_36 = arith.constant 0 : index
    %c0_37 = arith.constant 0 : index
    %52 = vector.load %arg2[%c1_35, %c0_36, %c0_37] : memref<4x256x128xbf16, #tpu.memory_space<vmem>>, vector<1x256x128xbf16>
    %53 = vector.shape_cast %52 : vector<1x256x128xbf16> to vector<256x128xbf16>
    %cst_38 = arith.constant dense<0.000000e+00> : vector<24x128xf32>
    %54 = tpu.matmul %51, %53, %cst_38 {dimension_numbers = #tpu.dot_dimension_numbers<[1], [0], [0], [1], [0, 0, 1, 1], [], []>} : vector<24x256xbf16>, vector<256x128xbf16>, vector<24x128xf32> -> vector<24x128xf32>
    %55 = arith.addf %50, %54 : vector<24x128xf32>
    %56 = vector.extract_strided_slice %44 {offsets = [5, 0], sizes = [24, 256], strides = [1, 1]} : vector<32x256xbf16> to vector<24x256xbf16>
    %c2_39 = arith.constant 2 : index
    %c0_40 = arith.constant 0 : index
    %c0_41 = arith.constant 0 : index
    %57 = vector.load %arg2[%c2_39, %c0_40, %c0_41] : memref<4x256x128xbf16, #tpu.memory_space<vmem>>, vector<1x256x128xbf16>
    %58 = vector.shape_cast %57 : vector<1x256x128xbf16> to vector<256x128xbf16>
    %cst_42 = arith.constant dense<0.000000e+00> : vector<24x128xf32>
    %59 = tpu.matmul %56, %58, %cst_42 {dimension_numbers = #tpu.dot_dimension_numbers<[1], [0], [0], [1], [0, 0, 1, 1], [], []>} : vector<24x256xbf16>, vector<256x128xbf16>, vector<24x128xf32> -> vector<24x128xf32>
    %60 = arith.addf %55, %59 : vector<24x128xf32>
    %61 = vector.extract_strided_slice %44 {offsets = [6, 0], sizes = [24, 256], strides = [1, 1]} : vector<32x256xbf16> to vector<24x256xbf16>
    %c3_43 = arith.constant 3 : index
    %c0_44 = arith.constant 0 : index
    %c0_45 = arith.constant 0 : index
    %62 = vector.load %arg2[%c3_43, %c0_44, %c0_45] : memref<4x256x128xbf16, #tpu.memory_space<vmem>>, vector<1x256x128xbf16>
    %63 = vector.shape_cast %62 : vector<1x256x128xbf16> to vector<256x128xbf16>
    %cst_46 = arith.constant dense<0.000000e+00> : vector<24x128xf32>
    %64 = tpu.matmul %61, %63, %cst_46 {dimension_numbers = #tpu.dot_dimension_numbers<[1], [0], [0], [1], [0, 0, 1, 1], [], []>} : vector<24x256xbf16>, vector<256x128xbf16>, vector<24x128xf32> -> vector<24x128xf32>
    %65 = arith.addf %60, %64 : vector<24x128xf32>
    %c0_47 = arith.constant 0 : index
    %c0_48 = arith.constant 0 : index
    %66 = vector.load %arg3[%c0_47, %c0_48] : memref<1x128xf32, #tpu.memory_space<vmem>>, vector<1x128xf32>
    %67 = vector.broadcast %66 : vector<1x128xf32> to vector<24x128xf32>
    %68 = arith.addf %65, %67 : vector<24x128xf32>
    %69 = arith.truncf %68 : vector<24x128xf32> to vector<24x128xbf16>
    %c1_49 = arith.constant 1 : index
    %c0_50 = arith.constant 0 : index
    %c0_51 = arith.constant 0 : index
    %70 = vector.load %arg5[%c1_49, %c0_50, %c0_51] : memref<2x24x128xbf16, #tpu.memory_space<vmem>>, vector<1x24x128xbf16>
    %71 = vector.shape_cast %70 : vector<1x24x128xbf16> to vector<24x128xbf16>
    %72 = vector.shape_cast %69 : vector<24x128xbf16> to vector<1x24x128xbf16>
    tpu.vector_store %arg5[%c1_49, %c0_50, %c0_51], %72 {strides = array<i32>} : memref<2x24x128xbf16, #tpu.memory_space<vmem>>, vector<1x24x128xbf16>,
    %c1_52 = arith.constant 1 : index
    %c0_53 = arith.constant 0 : index
    %c0_54 = arith.constant 0 : index
    %73 = vector.load %arg4[%c1_52, %c0_53, %c0_54] : memref<2x24x1xf32, #tpu.memory_space<vmem>>, vector<1x24x1xf32>
    %74 = vector.shape_cast %73 : vector<1x24x1xf32> to vector<24x1xf32>
    %75 = vector.broadcast %74 : vector<24x1xf32> to vector<24x128xf32>
    %76 = arith.mulf %68, %75 : vector<24x128xf32>
    %cst_55 = arith.constant dense<0.000000e+00> : vector<128xf32>
    %77 = vector.multi_reduction <add>, %76, %cst_55 [0] : vector<24x128xf32> to vector<128xf32>
    %78 = vector.shape_cast %77 : vector<128xf32> to vector<1x128xf32>
    %79 = arith.addf %38, %78 : vector<1x128xf32>
    %80 = arith.mulf %76, %76 : vector<24x128xf32>
    %cst_56 = arith.constant dense<0.000000e+00> : vector<128xf32>
    %81 = vector.multi_reduction <add>, %80, %cst_56 [0] : vector<24x128xf32> to vector<128xf32>
    %82 = vector.shape_cast %81 : vector<128xf32> to vector<1x128xf32>
    %83 = arith.addf %42, %82 : vector<1x128xf32>
    %84 = vector.shape_cast %79 : vector<1x128xf32> to vector<1x1x128xf32>
    %c0_57 = arith.constant 0 : index
    %c0_58 = arith.constant 0 : index
    %c0_59 = arith.constant 0 : index
    %85 = vector.load %arg6[%c0_57, %c0_58, %c0_59] : memref<1x1x128xf32, #tpu.memory_space<vmem>>, vector<1x1x128xf32>
    tpu.vector_store %arg6[%c0_57, %c0_58, %c0_59], %84 {strides = array<i32>} : memref<1x1x128xf32, #tpu.memory_space<vmem>>, vector<1x1x128xf32>,
    %86 = vector.shape_cast %83 : vector<1x128xf32> to vector<1x1x128xf32>
    %c0_60 = arith.constant 0 : index
    %c0_61 = arith.constant 0 : index
    %c0_62 = arith.constant 0 : index
    %87 = vector.load %arg7[%c0_60, %c0_61, %c0_62] : memref<1x1x128xf32, #tpu.memory_space<vmem>>, vector<1x1x128xf32>
    tpu.vector_store %arg7[%c0_60, %c0_61, %c0_62], %86 {strides = array<i32>} : memref<1x1x128xf32, #tpu.memory_space<vmem>>, vector<1x1x128xf32>,
    return
  }
  func.func @transform_0(%arg0: i32) -> (i32, i32, i32) {
    %c0_i32 = arith.constant 0 : i32
    %c0_i32_0 = arith.constant 0 : i32
    %c0_i32_1 = arith.constant 0 : i32
    return %arg0, %c0_i32, %c0_i32_0 : i32, i32, i32
  }
  func.func @transform_1(%arg0: i32) -> (i32, i32, i32) {
    %c0_i32 = arith.constant 0 : i32
    %c0_i32_0 = arith.constant 0 : i32
    %c0_i32_1 = arith.constant 0 : i32
    %c0_i32_2 = arith.constant 0 : i32
    return %c0_i32, %c0_i32_0, %c0_i32_1 : i32, i32, i32
  }
  func.func @transform_2(%arg0: i32) -> (i32, i32) {
    %c0_i32 = arith.constant 0 : i32
    %c0_i32_0 = arith.constant 0 : i32
    %c0_i32_1 = arith.constant 0 : i32
    return %c0_i32, %c0_i32_0 : i32, i32
  }
  func.func @transform_3(%arg0: i32) -> (i32, i32, i32) {
    %c0_i32 = arith.constant 0 : i32
    %c0_i32_0 = arith.constant 0 : i32
    %c0_i32_1 = arith.constant 0 : i32
    return %arg0, %c0_i32, %c0_i32_0 : i32, i32, i32
  }
  func.func @transform_4(%arg0: i32) -> (i32, i32, i32) {
    %c0_i32 = arith.constant 0 : i32
    %c0_i32_0 = arith.constant 0 : i32
    %c0_i32_1 = arith.constant 0 : i32
    return %arg0, %c0_i32, %c0_i32_0 : i32, i32, i32
  }
  func.func @transform_5(%arg0: i32) -> (i32, i32, i32) {
    %c0_i32 = arith.constant 0 : i32
    %c0_i32_0 = arith.constant 0 : i32
    %c0_i32_1 = arith.constant 0 : i32
    return %arg0, %c0_i32, %c0_i32_0 : i32, i32, i32
  }
  func.func @transform_6(%arg0: i32) -> (i32, i32, i32) {
    %c0_i32 = arith.constant 0 : i32
    %c0_i32_0 = arith.constant 0 : i32
    %c0_i32_1 = arith.constant 0 : i32
    return %arg0, %c0_i32, %c0_i32_0 : i32, i32, i32
  }
}

module attributes {stable_mosaic.version = 11 : i64} {
  func.func @kernel(%arg0: i32, %arg1: memref<2x24x128xbf16, #tpu.memory_space<vmem>>, %arg2: memref<1x1x128xf32, #tpu.memory_space<vmem>>, %arg3: memref<1x1x128xf32, #tpu.memory_space<vmem>>, %arg4: memref<1x128xf32, #tpu.memory_space<vmem>>, %arg5: memref<1x128xf32, #tpu.memory_space<vmem>>, %arg6: memref<24x128xbf16, #tpu.memory_space<vmem>>, %arg7: memref<1x1xf32, #tpu.memory_space<vmem>>, %arg8: memref<2x1x1xf32, #tpu.memory_space<vmem>>) attributes {dimension_semantics = [#tpu.dimension_semantics<parallel>], iteration_bounds = array<i64: 1>, scalar_prefetch = 0 : i64, scratch_operands = 0 : i64, tpu.core_type = #tpu.core_type<tc>, window_params = [{transform_indices = @transform_0, window_bounds = array<i64: 2, 24, 128>}, {pipeline_mode = #tpu.pipeline_mode<synchronous>, transform_indices = @transform_1, window_bounds = array<i64: 1, 1, 128>}, {pipeline_mode = #tpu.pipeline_mode<synchronous>, transform_indices = @transform_2, window_bounds = array<i64: 1, 1, 128>}, {pipeline_mode = #tpu.pipeline_mode<synchronous>, transform_indices = @transform_3, window_bounds = array<i64: 1, 128>}, {pipeline_mode = #tpu.pipeline_mode<synchronous>, transform_indices = @transform_4, window_bounds = array<i64: 1, 128>}, {pipeline_mode = #tpu.pipeline_mode<synchronous>, transform_indices = @transform_5, window_bounds = array<i64: 24, 128>}, {pipeline_mode = #tpu.pipeline_mode<synchronous>, transform_indices = @transform_6, window_bounds = array<i64: 1, 1>}, {transform_indices = @transform_7, window_bounds = array<i64: 2, 1, 1>}]} {
    %c0 = arith.constant 0 : index
    %c0_0 = arith.constant 0 : index
    %c0_1 = arith.constant 0 : index
    %0 = vector.load %arg2[%c0, %c0_0, %c0_1] : memref<1x1x128xf32, #tpu.memory_space<vmem>>, vector<1x1x128xf32>
    %cst = arith.constant dense<0.000000e+00> : vector<1x128xf32>
    %1 = vector.multi_reduction <add>, %0, %cst [0] : vector<1x1x128xf32> to vector<1x128xf32>
    %cst_2 = arith.constant 3.125000e-02 : f32
    %2 = vector.broadcast %cst_2 : f32 to vector<1x128xf32>
    %3 = arith.mulf %1, %2 : vector<1x128xf32>
    %c0_3 = arith.constant 0 : index
    %c0_4 = arith.constant 0 : index
    %c0_5 = arith.constant 0 : index
    %4 = vector.load %arg3[%c0_3, %c0_4, %c0_5] : memref<1x1x128xf32, #tpu.memory_space<vmem>>, vector<1x1x128xf32>
    %cst_6 = arith.constant dense<0.000000e+00> : vector<1x128xf32>
    %5 = vector.multi_reduction <add>, %4, %cst_6 [0] : vector<1x1x128xf32> to vector<1x128xf32>
    %cst_7 = arith.constant 3.125000e-02 : f32
    %6 = vector.broadcast %cst_7 : f32 to vector<1x128xf32>
    %7 = arith.mulf %5, %6 : vector<1x128xf32>
    %8 = arith.mulf %3, %3 : vector<1x128xf32>
    %9 = arith.subf %7, %8 : vector<1x128xf32>
    %cst_8 = arith.constant 9.99999974E-6 : f32
    %10 = vector.broadcast %cst_8 : f32 to vector<1x128xf32>
    %11 = arith.addf %9, %10 : vector<1x128xf32>
    %12 = math.rsqrt %11 : vector<1x128xf32>
    %c0_9 = arith.constant 0 : index
    %c0_10 = arith.constant 0 : index
    %13 = vector.load %arg4[%c0_9, %c0_10] : memref<1x128xf32, #tpu.memory_space<vmem>>, vector<1x128xf32>
    %14 = arith.mulf %12, %13 : vector<1x128xf32>
    %c0_11 = arith.constant 0 : index
    %c0_12 = arith.constant 0 : index
    %15 = vector.load %arg5[%c0_11, %c0_12] : memref<1x128xf32, #tpu.memory_space<vmem>>, vector<1x128xf32>
    %16 = arith.mulf %3, %14 : vector<1x128xf32>
    %17 = arith.subf %15, %16 : vector<1x128xf32>
    %c0_13 = arith.constant 0 : index
    %c0_14 = arith.constant 0 : index
    %c0_15 = arith.constant 0 : index
    %18 = vector.load %arg1[%c0_13, %c0_14, %c0_15] : memref<2x24x128xbf16, #tpu.memory_space<vmem>>, vector<2x24x128xbf16>
    %19 = arith.extf %18 : vector<2x24x128xbf16> to vector<2x24x128xf32>
    %20 = vector.shape_cast %14 : vector<1x128xf32> to vector<1x1x128xf32>
    %21 = vector.broadcast %20 : vector<1x1x128xf32> to vector<2x24x128xf32>
    %22 = arith.mulf %19, %21 : vector<2x24x128xf32>
    %23 = vector.shape_cast %17 : vector<1x128xf32> to vector<1x1x128xf32>
    %24 = vector.broadcast %23 : vector<1x1x128xf32> to vector<2x24x128xf32>
    %25 = arith.addf %22, %24 : vector<2x24x128xf32>
    %cst_16 = arith.constant 0.000000e+00 : f32
    %26 = vector.broadcast %cst_16 : f32 to vector<2x24x128xf32>
    %27 = arith.cmpf ogt, %25, %26 : vector<2x24x128xf32>
    %cst_17 = arith.constant 2.000000e-01 : f32
    %28 = vector.broadcast %cst_17 : f32 to vector<2x24x128xf32>
    %29 = arith.mulf %28, %25 : vector<2x24x128xf32>
    %30 = arith.select %27, %25, %29 : vector<2x24x128xi1>, vector<2x24x128xf32>
    %c0_18 = arith.constant 0 : index
    %c0_19 = arith.constant 0 : index
    %31 = vector.load %arg6[%c0_18, %c0_19] : memref<24x128xbf16, #tpu.memory_space<vmem>>, vector<24x128xbf16>
    %32 = arith.extf %31 : vector<24x128xbf16> to vector<24x128xf32>
    %33 = vector.shape_cast %32 : vector<24x128xf32> to vector<1x24x128xf32>
    %34 = vector.broadcast %33 : vector<1x24x128xf32> to vector<2x24x128xf32>
    %35 = arith.mulf %30, %34 : vector<2x24x128xf32>
    %cst_20 = arith.constant dense<0.000000e+00> : vector<2x24xf32>
    %36 = vector.multi_reduction <add>, %35, %cst_20 [2] : vector<2x24x128xf32> to vector<2x24xf32>
    %37 = vector.shape_cast %36 : vector<2x24xf32> to vector<2x24x1xf32>
    %cst_21 = arith.constant dense<0.000000e+00> : vector<2x1xf32>
    %38 = vector.multi_reduction <add>, %37, %cst_21 [1] : vector<2x24x1xf32> to vector<2x1xf32>
    %39 = vector.shape_cast %38 : vector<2x1xf32> to vector<2x1x1xf32>
    %c0_22 = arith.constant 0 : index
    %c0_23 = arith.constant 0 : index
    %40 = vector.load %arg7[%c0_22, %c0_23] : memref<1x1xf32, #tpu.memory_space<vmem>>, vector<1x1xf32>
    %41 = vector.shape_cast %40 : vector<1x1xf32> to vector<1x1x1xf32>
    %42 = vector.broadcast %41 : vector<1x1x1xf32> to vector<2x1x1xf32>
    %43 = arith.addf %39, %42 : vector<2x1x1xf32>
    %cst_24 = arith.constant 0.000000e+00 : f32
    %44 = vector.broadcast %cst_24 : f32 to vector<2x1x1xf32>
    %45 = arith.subf %44, %43 : vector<2x1x1xf32>
    %46 = math.exp %45 : vector<2x1x1xf32>
    %cst_25 = arith.constant 1.000000e+00 : f32
    %47 = vector.broadcast %cst_25 : f32 to vector<2x1x1xf32>
    %48 = arith.addf %47, %46 : vector<2x1x1xf32>
    %cst_26 = arith.constant 1.000000e+00 : f32
    %49 = vector.broadcast %cst_26 : f32 to vector<2x1x1xf32>
    %50 = arith.divf %49, %48 : vector<2x1x1xf32>
    %c0_27 = arith.constant 0 : index
    %c0_28 = arith.constant 0 : index
    %c0_29 = arith.constant 0 : index
    %51 = vector.load %arg8[%c0_27, %c0_28, %c0_29] : memref<2x1x1xf32, #tpu.memory_space<vmem>>, vector<2x1x1xf32>
    tpu.vector_store %arg8[%c0_27, %c0_28, %c0_29], %50 {strides = array<i32>} : memref<2x1x1xf32, #tpu.memory_space<vmem>>, vector<2x1x1xf32>,
    return
  }
  func.func @transform_0(%arg0: i32) -> (i32, i32, i32) {
    %c0_i32 = arith.constant 0 : i32
    %c0_i32_0 = arith.constant 0 : i32
    %c0_i32_1 = arith.constant 0 : i32
    return %arg0, %c0_i32, %c0_i32_0 : i32, i32, i32
  }
  func.func @transform_1(%arg0: i32) -> (i32, i32, i32) {
    %c0_i32 = arith.constant 0 : i32
    %c0_i32_0 = arith.constant 0 : i32
    %c0_i32_1 = arith.constant 0 : i32
    %c0_i32_2 = arith.constant 0 : i32
    return %c0_i32, %c0_i32_0, %c0_i32_1 : i32, i32, i32
  }
  func.func @transform_2(%arg0: i32) -> (i32, i32, i32) {
    %c0_i32 = arith.constant 0 : i32
    %c0_i32_0 = arith.constant 0 : i32
    %c0_i32_1 = arith.constant 0 : i32
    %c0_i32_2 = arith.constant 0 : i32
    return %c0_i32, %c0_i32_0, %c0_i32_1 : i32, i32, i32
  }
  func.func @transform_3(%arg0: i32) -> (i32, i32) {
    %c0_i32 = arith.constant 0 : i32
    %c0_i32_0 = arith.constant 0 : i32
    %c0_i32_1 = arith.constant 0 : i32
    return %c0_i32, %c0_i32_0 : i32, i32
  }
  func.func @transform_4(%arg0: i32) -> (i32, i32) {
    %c0_i32 = arith.constant 0 : i32
    %c0_i32_0 = arith.constant 0 : i32
    %c0_i32_1 = arith.constant 0 : i32
    return %c0_i32, %c0_i32_0 : i32, i32
  }
  func.func @transform_5(%arg0: i32) -> (i32, i32) {
    %c0_i32 = arith.constant 0 : i32
    %c0_i32_0 = arith.constant 0 : i32
    %c0_i32_1 = arith.constant 0 : i32
    return %c0_i32, %c0_i32_0 : i32, i32
  }
  func.func @transform_6(%arg0: i32) -> (i32, i32) {
    %c0_i32 = arith.constant 0 : i32
    %c0_i32_0 = arith.constant 0 : i32
    %c0_i32_1 = arith.constant 0 : i32
    return %c0_i32, %c0_i32_0 : i32, i32
  }
  func.func @transform_7(%arg0: i32) -> (i32, i32, i32) {
    %c0_i32 = arith.constant 0 : i32
    %c0_i32_0 = arith.constant 0 : i32
    %c0_i32_1 = arith.constant 0 : i32
    return %arg0, %c0_i32, %c0_i32_0 : i32, i32, i32
  }
}

</mosaic_0001>

<llo_original>
// kernel: discriminator_forward.4
$region0: #{discriminator_forward.4}
  #allocation0 [shape = 'u32[]', space=smem, size = 0x4, offset = 0x4, fixed_abs, tag = 'smem constant byte address 0x4 - core index']
  #allocation1 [shape = 'u32[72,128]{1,0:T(1,128)}', space=vmem, size = 0x9000, scoped, tag = 'internal scratch']
  %s0 = inlined_call_operand.vmem [shape: bf16[8,8], index: 0, kind: input, shape index: {}]
  %s1 = inlined_call_operand.hbm [shape: bf16[8,256], index: 1, kind: input, shape index: {}]
  %s2 = inlined_call_operand.vmem [shape: f32[1,256], index: 2, kind: input, shape index: {}]
  %s3 = inlined_call_operand.vmem [shape: bf16[8,256], index: 3, kind: output, shape index: {}]
  %s4 = sld [smem:[#allocation0]]
  $region26: #{discriminator_forward.4} parent=0
    _
  %s6 = ssub.s32 1, %s4
  %s7 = scalar_select 0, %s6, %s4
  $region1: #{discriminator_forward.4} parent=0
    #allocation2 [shape = 'u8[4096]{0}', space=vmem, size = 0x1000, scoped, tag = 'input window, operand 1, single buffered']
    #allocation3 [shape = 's32[1]{0}', space=sflag, size = 0x4, scoped, tag = 'scoped memory for discriminator_forward.4']
    %8 = vsyncpa [#allocation3], 0
    // Predicated region
    $region2: #{discriminator_forward.4} parent=1 // pred_check
      _
    $region3: #{discriminator_forward.4} parent=1 // pred_check_branch
      %10 = sbr.rel (0) target = $region5
    $region4: #{discriminator_forward.4} parent=1 // pred_region
      _
    $region5: #{discriminator_forward.4} parent=1 // pred_fallthru
      _
    // Predicated region
    $region6: #{discriminator_forward.4} parent=1 // pred_check
      _
    $region7: #{discriminator_forward.4} parent=1 // pred_check_branch
      %12 = sbr.rel (0) target = $region9
    $region8: #{discriminator_forward.4} parent=1 // pred_region
      %14 = vsyncadd [#allocation3], 0
      %s16 = sshll.u32 %s1, 4
      %s17 = int_to_ptr.hbm [resolvable:$true] %s16
      %s18 = sshll.u32 [#allocation2], 4
      %s19 = int_to_ptr.vmem [resolvable:$true] %s18
      %21 = dma.hbm_to_vmem [thread:$0]  %s17, 128, %s19, [#allocation3]
    $region9: #{discriminator_forward.4} parent=1 // pred_fallthru
      _
    // Predicated region
    $region10: #{discriminator_forward.4} parent=1 // pred_check
      _
    $region11: #{discriminator_forward.4} parent=1 // pred_check_branch
      %23 = sbr.rel (0) target = $region13
    $region12: #{discriminator_forward.4} parent=1 // pred_region
      _
    $region13: #{discriminator_forward.4} parent=1 // pred_fallthru
      _
    // Predicated region
    $region14: #{discriminator_forward.4} parent=1 // pred_check
      _
    $region15: #{discriminator_forward.4} parent=1 // pred_check_branch
      %25 = sbr.rel (0) target = $region17
    $region16: #{discriminator_forward.4} parent=1 // pred_region
      %27 = dma.done [#allocation3], 128
    $region17: #{discriminator_forward.4} parent=1 // pred_fallthru
      _
    %v29 = vld [vmem:[%s0] sm:$0xf]
    %v30 = vld [vmem:[#allocation2] sm:$0xff]
    %v31 = vld [vmem:[%s2] sm:$0x3]
    %v33 = vperm.slane %v31, 0
    %v34 = vperm.slane %v31, 1
    %v38 = vunpack.c.l.b16 %v30
    %v39 = vunpack.c.h.b16 %v30
    %v40 = vpack.c.b16 %v38, %v38
    %v41 = vpack.c.b16 %v39, %v39
    %vm42 = vcmask 64512
    %v44 = vsel %vm42, %v29, 0
    %vm46 = vcmask 1043456
    %v48 = vsel %vm46, %v40, 0
    %v51 = vsel %vm46, %v41, 0
    %53 = vmatpush.bf16.msra.mxu0 0
    %54 = vmatpush.bf16.msra.mxu0 0
    %55 = vmatpush.bf16.msra.mxu0 0
    %56 = vmatpush.bf16.msra.mxu0 0
    %57 = vmatpush.bf16.msra.mxu0 0
    %58 = vmatpush.bf16.msra.mxu0 0
    %59 = vmatpush.bf16.msra.mxu0 0
    %60 = vmatpush.bf16.msra.mxu0 %v48
    %61 = vmatmul.bf16.gmra.mxu0 %v44
    %v62 = vpop.f32.mrf.mxu0
    %v63 = vadd.f32 %v33, %v62
    %v64 = vpop.f32.mrf.mxu0
    %65 = vdwg.mxu0
    %66 = vmatpush.bf16.msra.mxu0 0
    %67 = vmatpush.bf16.msra.mxu0 0
    %68 = vmatpush.bf16.msra.mxu0 0
    %69 = vmatpush.bf16.msra.mxu0 0
    %70 = vmatpush.bf16.msra.mxu0 0
    %71 = vmatpush.bf16.msra.mxu0 0
    %72 = vmatpush.bf16.msra.mxu0 0
    %73 = vmatpush.bf16.msra.mxu0 %v51
    %74 = vmatmul.bf16.gmra.mxu0 %v44
    %v75 = vpop.f32.mrf.mxu0
    %v76 = vadd.f32 %v34, %v75
    %v77 = vpop.f32.mrf.mxu0
    %78 = vdwg.mxu0
    %v79 = vpack.c.bf16 %v76, %v63
    %80 = vst [vmem:[%s3] sm:$0xff] %v79
    // Predicated region
    $region18: #{discriminator_forward.4} parent=1 // pred_check
      _
    $region19: #{discriminator_forward.4} parent=1 // pred_check_branch
      %82 = sbr.rel (0) target = $region21
    $region20: #{discriminator_forward.4} parent=1 // pred_region
      _
    $region21: #{discriminator_forward.4} parent=1 // pred_fallthru
      _
    // Predicated region
    $region22: #{discriminator_forward.4} parent=1 // pred_check
      _
    $region23: #{discriminator_forward.4} parent=1 // pred_check_branch
      %84 = sbr.rel (0) target = $region25
    $region24: #{discriminator_forward.4} parent=1 // pred_region
      _
    $region25: #{discriminator_forward.4} parent=1 // pred_fallthru
      _
    %85 = vsyncpa [#allocation3], 1

// kernel: discriminator_forward.5
$region0: #{discriminator_forward.5}
  #allocation0 [shape = 'u32[]', space=smem, size = 0x4, offset = 0x4, fixed_abs, tag = 'smem constant byte address 0x4 - core index']
  #allocation1 [shape = 'u32[72,128]{1,0:T(1,128)}', space=vmem, size = 0x9000, scoped, tag = 'internal scratch']
  %s0 = inlined_call_operand.vmem [shape: bf16[128,32], index: 0, kind: input, shape index: {}]
  %s1 = inlined_call_operand.vmem [shape: bf16[32,128], index: 1, kind: input, shape index: {}]
  %s2 = inlined_call_operand.vmem [shape: f32[1,128], index: 2, kind: input, shape index: {}]
  %s3 = inlined_call_operand.vmem [shape: bf16[128,128], index: 3, kind: output, shape index: {}]
  %s4 = sld [smem:[#allocation0]]
  $region22: #{discriminator_forward.5} parent=0
    _
  %s6 = ssub.s32 1, %s4
  %s7 = scalar_select 0, %s6, %s4
  // Predicated region
  $region2: #{discriminator_forward.5} parent=0 // pred_check
    _
  $region3: #{discriminator_forward.5} parent=0 // pred_check_branch
    %9 = sbr.rel (0) target = $region5
  $region4: #{discriminator_forward.5} parent=0 // pred_region
    _
  $region5: #{discriminator_forward.5} parent=0 // pred_fallthru
    _
  // Predicated region
  $region6: #{discriminator_forward.5} parent=0 // pred_check
    _
  $region7: #{discriminator_forward.5} parent=0 // pred_check_branch
    %11 = sbr.rel (0) target = $region9
  $region8: #{discriminator_forward.5} parent=0 // pred_region
    _
  $region9: #{discriminator_forward.5} parent=0 // pred_fallthru
    _
  // Predicated region
  $region10: #{discriminator_forward.5} parent=0 // pred_check
    _
  $region11: #{discriminator_forward.5} parent=0 // pred_check_branch
    %13 = sbr.rel (0) target = $region13
  $region12: #{discriminator_forward.5} parent=0 // pred_region
    _
  $region13: #{discriminator_forward.5} parent=0 // pred_fallthru
    _
  %v15 = vld [vmem:[%s0] sm:$0xf]
  %v16 = vld [vmem:[%s0 + $0x4] sm:$0xf]
  %v17 = vld [vmem:[%s0 + $0x8] sm:$0xf]
  %v18 = vld [vmem:[%s0 + $0xc] sm:$0xf]
  %v19 = vld [vmem:[%s0 + $0x10] sm:$0xf]
  %v20 = vld [vmem:[%s0 + $0x14] sm:$0xf]
  %v21 = vld [vmem:[%s0 + $0x18] sm:$0xf]
  %v22 = vld [vmem:[%s0 + $0x1c] sm:$0xf]
  %v23 = vld [vmem:[%s0 + $0x20] sm:$0xf]
  %v24 = vld [vmem:[%s0 + $0x24] sm:$0xf]
  %v25 = vld [vmem:[%s0 + $0x28] sm:$0xf]
  %v26 = vld [vmem:[%s0 + $0x2c] sm:$0xf]
  %v27 = vld [vmem:[%s0 + $0x30] sm:$0xf]
  %v28 = vld [vmem:[%s0 + $0x34] sm:$0xf]
  %v29 = vld [vmem:[%s0 + $0x38] sm:$0xf]
  %v30 = vld [vmem:[%s0 + $0x3c] sm:$0xf]
  %v31 = vld [vmem:[%s1] sm:$0xf]
  %v32 = vld [vmem:[%s1 + $0x4] sm:$0xf]
  %v33 = vld [vmem:[%s1 + $0x8] sm:$0xf]
  %v34 = vld [vmem:[%s1 + $0xc] sm:$0xf]
  %v35 = vld [vmem:[%s2] sm:$0x1]
  %v37 = vperm.slane %v35, 0
  %v55 = vunpack.c.l.b16 %v15
  %v56 = vunpack.c.l.b16 %v16
  %v57 = vunpack.c.l.b16 %v17
  %v58 = vunpack.c.l.b16 %v18
  %v59 = vunpack.c.l.b16 %v19
  %v60 = vunpack.c.l.b16 %v20
  %v61 = vunpack.c.l.b16 %v21
  %v62 = vunpack.c.l.b16 %v22
  %v63 = vunpack.c.l.b16 %v23
  %v64 = vunpack.c.l.b16 %v24
  %v65 = vunpack.c.l.b16 %v25
  %v66 = vunpack.c.l.b16 %v26
  %v67 = vunpack.c.l.b16 %v27
  %v68 = vunpack.c.l.b16 %v28
  %v69 = vunpack.c.l.b16 %v29
  %v70 = vunpack.c.l.b16 %v30
  %v71 = vpack.c.b16 %v56, %v55
  %v72 = vpack.c.b16 %v58, %v57
  %v73 = vpack.c.b16 %v60, %v59
  %v74 = vpack.c.b16 %v62, %v61
  %v75 = vpack.c.b16 %v64, %v63
  %v76 = vpack.c.b16 %v66, %v65
  %v77 = vpack.c.b16 %v68, %v67
  %v78 = vpack.c.b16 %v70, %v69
  %v83 = vunpack.c.l.b16 %v31
  %v84 = vunpack.c.l.b16 %v32
  %v85 = vunpack.c.l.b16 %v33
  %v86 = vunpack.c.l.b16 %v34
  %v87 = vpack.c.b16 %v84, %v83
  %v88 = vpack.c.b16 %v86, %v85
  %vm91 = vcmask 261120
  %v93 = vsel %vm91, %v71, 0
  %v96 = vsel %vm91, %v72, 0
  %v99 = vsel %vm91, %v73, 0
  %v102 = vsel %vm91, %v74, 0
  %v105 = vsel %vm91, %v75, 0
  %v108 = vsel %vm91, %v76, 0
  %v111 = vsel %vm91, %v77, 0
  %v114 = vsel %vm91, %v78, 0
  %116 = vmatpush.bf16.msra.mxu0 0
  %117 = vmatpush.bf16.msra.mxu0 0
  %118 = vmatpush.bf16.msra.mxu0 0
  %119 = vmatpush.bf16.msra.mxu0 0
  %120 = vmatpush.bf16.msra.mxu0 0
  %121 = vmatpush.bf16.msra.mxu0 0
  %122 = vmatpush.bf16.msra.mxu0 %v88
  %123 = vmatpush.bf16.msra.mxu0 %v87
  %124 = vmatmul.bf16.gmra.mxu0 %v93
  %v125 = vpop.f32.mrf.mxu0
  %v126 = vadd.f32 %v37, %v125
  %v127 = vpop.f32.mrf.mxu0
  %v128 = vadd.f32 %v37, %v127
  %129 = vmatmul.bf16.gmra.mxu0 %v96
  %v130 = vpop.f32.mrf.mxu0
  %v131 = vadd.f32 %v37, %v130
  %v132 = vpop.f32.mrf.mxu0
  %v133 = vadd.f32 %v37, %v132
  %134 = vmatmul.bf16.gmra.mxu0 %v99
  %v135 = vpop.f32.mrf.mxu0
  %v136 = vadd.f32 %v37, %v135
  %v137 = vpop.f32.mrf.mxu0
  %v138 = vadd.f32 %v37, %v137
  %139 = vmatmul.bf16.gmra.mxu0 %v102
  %v140 = vpop.f32.mrf.mxu0
  %v141 = vadd.f32 %v37, %v140
  %v142 = vpop.f32.mrf.mxu0
  %v143 = vadd.f32 %v37, %v142
  %144 = vmatmul.bf16.gmra.mxu0 %v105
  %v145 = vpop.f32.mrf.mxu0
  %v146 = vadd.f32 %v37, %v145
  %v147 = vpop.f32.mrf.mxu0
  %v148 = vadd.f32 %v37, %v147
  %149 = vmatmul.bf16.gmra.mxu0 %v108
  %v150 = vpop.f32.mrf.mxu0
  %v151 = vadd.f32 %v37, %v150
  %v152 = vpop.f32.mrf.mxu0
  %v153 = vadd.f32 %v37, %v152
  %154 = vmatmul.bf16.gmra.mxu0 %v111
  %v155 = vpop.f32.mrf.mxu0
  %v156 = vadd.f32 %v37, %v155
  %v157 = vpop.f32.mrf.mxu0
  %v158 = vadd.f32 %v37, %v157
  %159 = vmatmul.bf16.gmra.mxu0 %v114
  %v160 = vpop.f32.mrf.mxu0
  %v161 = vadd.f32 %v37, %v160
  %v162 = vpop.f32.mrf.mxu0
  %v163 = vadd.f32 %v37, %v162
  %164 = vdwg.mxu0
  %vm165 = vcmp.gt.f32.partialorder %v126, 0.0
  %vm166 = vcmp.gt.f32.partialorder %v128, 0.0
  %vm167 = vcmp.gt.f32.partialorder %v131, 0.0
  %vm168 = vcmp.gt.f32.partialorder %v133, 0.0
  %vm169 = vcmp.gt.f32.partialorder %v136, 0.0
  %vm170 = vcmp.gt.f32.partialorder %v138, 0.0
  %vm171 = vcmp.gt.f32.partialorder %v141, 0.0
  %vm172 = vcmp.gt.f32.partialorder %v143, 0.0
  %vm173 = vcmp.gt.f32.partialorder %v146, 0.0
  %vm174 = vcmp.gt.f32.partialorder %v148, 0.0
  %vm175 = vcmp.gt.f32.partialorder %v151, 0.0
  %vm176 = vcmp.gt.f32.partialorder %v153, 0.0
  %vm177 = vcmp.gt.f32.partialorder %v156, 0.0
  %vm178 = vcmp.gt.f32.partialorder %v158, 0.0
  %vm179 = vcmp.gt.f32.partialorder %v161, 0.0
  %vm180 = vcmp.gt.f32.partialorder %v163, 0.0
  %v181 = vmul.f32 %v126, 0.2
  %v182 = vmul.f32 %v128, 0.2
  %v183 = vmul.f32 %v131, 0.2
  %v184 = vmul.f32 %v133, 0.2
  %v185 = vmul.f32 %v136, 0.2
  %v186 = vmul.f32 %v138, 0.2
  %v187 = vmul.f32 %v141, 0.2
  %v188 = vmul.f32 %v143, 0.2
  %v189 = vmul.f32 %v146, 0.2
  %v190 = vmul.f32 %v148, 0.2
  %v191 = vmul.f32 %v151, 0.2
  %v192 = vmul.f32 %v153, 0.2
  %v193 = vmul.f32 %v156, 0.2
  %v194 = vmul.f32 %v158, 0.2
  %v195 = vmul.f32 %v161, 0.2
  %v196 = vmul.f32 %v163, 0.2
  %v197 = vsel %vm165, %v126, %v181
  %v198 = vsel %vm166, %v128, %v182
  %v199 = vsel %vm167, %v131, %v183
  %v200 = vsel %vm168, %v133, %v184
  %v201 = vsel %vm169, %v136, %v185
  %v202 = vsel %vm170, %v138, %v186
  %v203 = vsel %vm171, %v141, %v187
  %v204 = vsel %vm172, %v143, %v188
  %v205 = vsel %vm173, %v146, %v189
  %v206 = vsel %vm174, %v148, %v190
  %v207 = vsel %vm175, %v151, %v191
  %v208 = vsel %vm176, %v153, %v192
  %v209 = vsel %vm177, %v156, %v193
  %v210 = vsel %vm178, %v158, %v194
  %v211 = vsel %vm179, %v161, %v195
  %v212 = vsel %vm180, %v163, %v196
  %v213 = vpack.c.bf16 %v197, %v197
  %v214 = vpack.c.bf16 %v198, %v198
  %v215 = vpack.c.bf16 %v199, %v199
  %v216 = vpack.c.bf16 %v200, %v200
  %v217 = vpack.c.bf16 %v201, %v201
  %v218 = vpack.c.bf16 %v202, %v202
  %v219 = vpack.c.bf16 %v203, %v203
  %v220 = vpack.c.bf16 %v204, %v204
  %v221 = vpack.c.bf16 %v205, %v205
  %v222 = vpack.c.bf16 %v206, %v206
  %v223 = vpack.c.bf16 %v207, %v207
  %v224 = vpack.c.bf16 %v208, %v208
  %v225 = vpack.c.bf16 %v209, %v209
  %v226 = vpack.c.bf16 %v210, %v210
  %v227 = vpack.c.bf16 %v211, %v211
  %v228 = vpack.c.bf16 %v212, %v212
  %229 = vst [vmem:[%s3] sm:$0xf] %v213
  %230 = vst [vmem:[%s3 + $0x4] sm:$0xf] %v214
  %231 = vst [vmem:[%s3 + $0x8] sm:$0xf] %v215
  %232 = vst [vmem:[%s3 + $0xc] sm:$0xf] %v216
  %233 = vst [vmem:[%s3 + $0x10] sm:$0xf] %v217
  %234 = vst [vmem:[%s3 + $0x14] sm:$0xf] %v218
  %235 = vst [vmem:[%s3 + $0x18] sm:$0xf] %v219
  %236 = vst [vmem:[%s3 + $0x1c] sm:$0xf] %v220
  %237 = vst [vmem:[%s3 + $0x20] sm:$0xf] %v221
  %238 = vst [vmem:[%s3 + $0x24] sm:$0xf] %v222
  %239 = vst [vmem:[%s3 + $0x28] sm:$0xf] %v223
  %240 = vst [vmem:[%s3 + $0x2c] sm:$0xf] %v224
  %241 = vst [vmem:[%s3 + $0x30] sm:$0xf] %v225
  %242 = vst [vmem:[%s3 + $0x34] sm:$0xf] %v226
  %243 = vst [vmem:[%s3 + $0x38] sm:$0xf] %v227
  %244 = vst [vmem:[%s3 + $0x3c] sm:$0xf] %v228
  // Predicated region
  $region14: #{discriminator_forward.5} parent=0 // pred_check
    _
  $region15: #{discriminator_forward.5} parent=0 // pred_check_branch
    %246 = sbr.rel (0) target = $region17
  $region16: #{discriminator_forward.5} parent=0 // pred_region
    _
  $region17: #{discriminator_forward.5} parent=0 // pred_fallthru
    _
  // Predicated region
  $region18: #{discriminator_forward.5} parent=0 // pred_check
    _
  $region19: #{discriminator_forward.5} parent=0 // pred_check_branch
    %248 = sbr.rel (0) target = $region21
  $region20: #{discriminator_forward.5} parent=0 // pred_region
    _
  $region21: #{discriminator_forward.5} parent=0 // pred_fallthru
    _

// kernel: discriminator_forward.7
$region0: #{discriminator_forward.7}
  #allocation0 [shape = 'u32[]', space=smem, size = 0x4, offset = 0x4, fixed_abs, tag = 'smem constant byte address 0x4 - core index']
  #allocation1 [shape = 'u32[72,128]{1,0:T(1,128)}', space=vmem, size = 0x9000, scoped, tag = 'internal scratch']
  #allocation2 [shape = 'f32[1,1]{1,0:T(1,128)S(1)}', space=vmem, size = 0x200, scoped, tag = 'scoped memory for discriminator_forward.7']
  %s0 = inlined_call_operand.vmem [shape: bf16[2,24,128], index: 0, kind: input, shape index: {}]
  %s1 = inlined_call_operand.vmem [shape: f32[1,1,128], index: 1, kind: input, shape index: {}]
  %s2 = inlined_call_operand.vmem [shape: f32[1,1,128], index: 2, kind: input, shape index: {}]
  %s3 = inlined_call_operand.vmem [shape: f32[1,128], index: 3, kind: input, shape index: {}]
  %s4 = inlined_call_operand.vmem [shape: f32[1,128], index: 4, kind: input, shape index: {}]
  %s5 = inlined_call_operand.vmem [shape: bf16[24,128], index: 5, kind: input, shape index: {}]
  %s6 = inlined_call_operand.<no memory space> [shape: f32[1,1], index: 6, kind: input, shape index: {}]
  %s7 = inlined_call_operand.vmem [shape: f32[2,1,1], index: 7, kind: output, shape index: {}]
  %s8 = sld [smem:[#allocation0]]
  $region38: #{discriminator_forward.7} parent=0
    _
  %s10 = ssub.s32 1, %s8
  %s11 = scalar_select 0, %s10, %s8
  %v12 = vstv %s6
  %13 = vst [vmem:[#allocation2] sm:$0x1] %v12
  // Predicated region
  $region2: #{discriminator_forward.7} parent=0 // pred_check
    _
  $region3: #{discriminator_forward.7} parent=0 // pred_check_branch
    %15 = sbr.rel (0) target = $region5
  $region4: #{discriminator_forward.7} parent=0 // pred_region
    _
  $region5: #{discriminator_forward.7} parent=0 // pred_fallthru
    _
  // Predicated region
  $region6: #{discriminator_forward.7} parent=0 // pred_check
    _
  $region7: #{discriminator_forward.7} parent=0 // pred_check_branch
    %17 = sbr.rel (0) target = $region9
  $region8: #{discriminator_forward.7} parent=0 // pred_region
    _
  $region9: #{discriminator_forward.7} parent=0 // pred_fallthru
    _
  // Predicated region
  $region10: #{discriminator_forward.7} parent=0 // pred_check
    _
  $region11: #{discriminator_forward.7} parent=0 // pred_check_branch
    %19 = sbr.rel (0) target = $region13
  $region12: #{discriminator_forward.7} parent=0 // pred_region
    _
  $region13: #{discriminator_forward.7} parent=0 // pred_fallthru
    _
  // Predicated region
  $region14: #{discriminator_forward.7} parent=0 // pred_check
    _
  $region15: #{discriminator_forward.7} parent=0 // pred_check_branch
    %21 = sbr.rel (0) target = $region17
  $region16: #{discriminator_forward.7} parent=0 // pred_region
    _
  $region17: #{discriminator_forward.7} parent=0 // pred_fallthru
    _
  // Predicated region
  $region18: #{discriminator_forward.7} parent=0 // pred_check
    _
  $region19: #{discriminator_forward.7} parent=0 // pred_check_branch
    %23 = sbr.rel (0) target = $region21
  $region20: #{discriminator_forward.7} parent=0 // pred_region
    _
  $region21: #{discriminator_forward.7} parent=0 // pred_fallthru
    _
  // Predicated region
  $region22: #{discriminator_forward.7} parent=0 // pred_check
    _
  $region23: #{discriminator_forward.7} parent=0 // pred_check_branch
    %25 = sbr.rel (0) target = $region25
  $region24: #{discriminator_forward.7} parent=0 // pred_region
    _
  $region25: #{discriminator_forward.7} parent=0 // pred_fallthru
    _
  // Predicated region
  $region26: #{discriminator_forward.7} parent=0 // pred_check
    _
  $region27: #{discriminator_forward.7} parent=0 // pred_check_branch
    %27 = sbr.rel (0) target = $region29
  $region28: #{discriminator_forward.7} parent=0 // pred_region
    _
  $region29: #{discriminator_forward.7} parent=0 // pred_fallthru
    _
  %v28 = vld [vmem:[%s1] sm:$0x1]
  %v29 = vadd.f32 %v28, 0.0
  %v30 = vmul.f32 %v29, 0.03125
  %v31 = vld [vmem:[%s2] sm:$0x1]
  %v32 = vadd.f32 %v31, 0.0
  %v33 = vmul.f32 %v32, 0.03125
  %v34 = vmul.f32 %v30, %v30
  %v35 = vsub.f32 %v33, %v34
  %v36 = vadd.f32 %v35, 1e-05
  %v37 = vrsqrt.pop %v36
  %v38 = vmul.f32 %v37, %v36
  %v39 = vmul.f32 %v38, %v37
  %v40 = vmul.f32 0.5, %v39
  %v41 = vsub.f32 1.5, %v40
  %v42 = vmul.f32 %v37, %v41
  %vm43 = vweird.f32 %v36
  %vm44 = vweird.f32 %v37
  %vm45 = vmor %vm43, %vm44
  %v46 = vsel %vm45, %v37, %v42
  %v47 = vld [vmem:[%s3] sm:$0x1]
  %v48 = vmul.f32 %v46, %v47
  %v49 = vld [vmem:[%s4] sm:$0x1]
  %v50 = vmul.f32 %v30, %v48
  %v51 = vsub.f32 %v49, %v50
  %v52 = vld [vmem:[%s0] sm:$0xf]
  %v53 = vld [vmem:[%s0 + $0x4] sm:$0xf]
  %v54 = vld [vmem:[%s0 + $0x8] sm:$0xf]
  %v55 = vld [vmem:[%s0 + $0xc] sm:$0xf]
  %v56 = vld [vmem:[%s0 + $0x10] sm:$0xf]
  %v57 = vld [vmem:[%s0 + $0x14] sm:$0xf]
  %v58 = vunpack.c.l.bf16 %v52
  %v59 = vunpack.c.l.bf16 %v53
  %v60 = vunpack.c.l.bf16 %v54
  %v61 = vunpack.c.l.bf16 %v55
  %v62 = vunpack.c.l.bf16 %v56
  %v63 = vunpack.c.l.bf16 %v57
  %v65 = vperm.slane %v48, 0
  %v67 = vmul.f32 %v58, %v65
  %v68 = vmul.f32 %v59, %v65
  %v69 = vmul.f32 %v60, %v65
  %v70 = vmul.f32 %v61, %v65
  %v71 = vmul.f32 %v62, %v65
  %v72 = vmul.f32 %v63, %v65
  %v74 = vperm.slane %v51, 0
  %v76 = vadd.f32 %v67, %v74
  %v77 = vadd.f32 %v68, %v74
  %v78 = vadd.f32 %v69, %v74
  %v79 = vadd.f32 %v70, %v74
  %v80 = vadd.f32 %v71, %v74
  %v81 = vadd.f32 %v72, %v74
  %vm82 = vcmp.gt.f32.partialorder %v76, 0.0
  %vm83 = vcmp.gt.f32.partialorder %v77, 0.0
  %vm84 = vcmp.gt.f32.partialorder %v78, 0.0
  %vm85 = vcmp.gt.f32.partialorder %v79, 0.0
  %vm86 = vcmp.gt.f32.partialorder %v80, 0.0
  %vm87 = vcmp.gt.f32.partialorder %v81, 0.0
  %v88 = vmul.f32 %v76, 0.2
  %v89 = vmul.f32 %v77, 0.2
  %v90 = vmul.f32 %v78, 0.2
  %v91 = vmul.f32 %v79, 0.2
  %v92 = vmul.f32 %v80, 0.2
  %v93 = vmul.f32 %v81, 0.2
  %v94 = vsel %vm82, %v76, %v88
  %v95 = vsel %vm83, %v77, %v89
  %v96 = vsel %vm84, %v78, %v90
  %v97 = vsel %vm85, %v79, %v91
  %v98 = vsel %vm86, %v80, %v92
  %v99 = vsel %vm87, %v81, %v93
  %v100 = vld [vmem:[%s5] sm:$0xf]
  %v101 = vld [vmem:[%s5 + $0x4] sm:$0xf]
  %v102 = vld [vmem:[%s5 + $0x8] sm:$0xf]
  %v103 = vunpack.c.l.bf16 %v100
  %v104 = vunpack.c.l.bf16 %v101
  %v105 = vunpack.c.l.bf16 %v102
  %v106 = vmul.f32 %v94, %v103
  %v107 = vmul.f32 %v95, %v104
  %v108 = vmul.f32 %v96, %v105
  %v109 = vmul.f32 %v97, %v103
  %v110 = vmul.f32 %v98, %v104
  %v111 = vmul.f32 %v99, %v105
  %112 = vadd.xlane.f32.xlu0 %v106
  %v113 = vpop.xlane.xlu0 %112
  %114 = vadd.xlane.f32.xlu0 %v107
  %v115 = vpop.xlane.xlu0 %114
  %116 = vadd.xlane.f32.xlu0 %v108
  %v117 = vpop.xlane.xlu0 %116
  %118 = vadd.xlane.f32.xlu0 %v109
  %v119 = vpop.xlane.xlu0 %118
  %120 = vadd.xlane.f32.xlu0 %v110
  %v121 = vpop.xlane.xlu0 %120
  %122 = vadd.xlane.f32.xlu0 %v111
  %v123 = vpop.xlane.xlu0 %122
  %v124 = vadd.f32 %v113, %v115
  %v125 = vadd.f32 %v124, %v117
  %v126 = vrot.slane %v125, 4
  %v127 = vadd.f32 %v125, %v126
  %v128 = vrot.slane %v127, 2
  %v129 = vadd.f32 %v127, %v128
  %v130 = vrot.slane %v129, 1
  %v131 = vadd.f32 %v129, %v130
  %v132 = vadd.f32 %v119, %v121
  %v133 = vadd.f32 %v132, %v123
  %v134 = vrot.slane %v133, 4
  %v135 = vadd.f32 %v133, %v134
  %v136 = vrot.slane %v135, 2
  %v137 = vadd.f32 %v135, %v136
  %v138 = vrot.slane %v137, 1
  %v139 = vadd.f32 %v137, %v138
  %v140 = vld [vmem:[#allocation2] sm:$0x1]
  %v141 = vadd.f32 %v131, %v140
  %v142 = vadd.f32 %v139, %v140
  %v143 = vsub.f32 0.0, %v141
  %v144 = vsub.f32 0.0, %v142
  %v145 = vmul.f32 %v143, 1.442695
  %v146 = vpow.pop %v145
  %v147 = vmul.f32 %v144, 1.442695
  %v148 = vpow.pop %v147
  %v149 = vadd.f32 %v146, 1.0
  %v150 = vadd.f32 %v148, 1.0
  %v151 = vrcp.pop %v149
  %v152 = vmul.f32 %v149, %v151
  %v153 = vsub.f32 1.0, %v152
  %v154 = vmul.f32 %v151, %v153
  %v155 = vadd.f32 %v151, %v154
  %vm156 = vweird.f32 %v149
  %vm157 = vweird.f32 %v151
  %vm158 = vmor %vm156, %vm157
  %v159 = vsel %vm158, %v151, %v155
  %v160 = vand.u32 2147483647, %v149
  %vm161 = vcmp.eq.f32.partialorder %v160, 8.507059e+37
  %v162 = vand.u32 %v149, 2147483648
  %v163 = vor.u32 1.1754944e-38, %v162
  %v164 = vsel %vm161, %v163, %v159
  %v165 = vmul.f32 1.0, %v164
  %v166 = vrcp.pop %v150
  %v167 = vmul.f32 %v150, %v166
  %v168 = vsub.f32 1.0, %v167
  %v169 = vmul.f32 %v166, %v168
  %v170 = vadd.f32 %v166, %v169
  %vm171 = vweird.f32 %v150
  %vm172 = vweird.f32 %v166
  %vm173 = vmor %vm171, %vm172
  %v174 = vsel %vm173, %v166, %v170
  %v175 = vand.u32 2147483647, %v150
  %vm176 = vcmp.eq.f32.partialorder %v175, 8.507059e+37
  %v177 = vand.u32 %v150, 2147483648
  %v178 = vor.u32 1.1754944e-38, %v177
  %v179 = vsel %vm176, %v178, %v174
  %v180 = vmul.f32 1.0, %v179
  %vm181 = vcmask 0
  %182 = vst.msk [vmem:[%s7] sm:$0x1] %vm181, %v165
  %183 = vst.msk [vmem:[%s7 + $0x1] sm:$0x1] %vm181, %v180
  // Predicated region
  $region30: #{discriminator_forward.7} parent=0 // pred_check
    _
  $region31: #{discriminator_forward.7} parent=0 // pred_check_branch
    %185 = sbr.rel (0) target = $region33
  $region32: #{discriminator_forward.7} parent=0 // pred_region
    _
  $region33: #{discriminator_forward.7} parent=0 // pred_fallthru
    _
  // Predicated region
  $region34: #{discriminator_forward.7} parent=0 // pred_check
    _
  $region35: #{discriminator_forward.7} parent=0 // pred_check_branch
    %187 = sbr.rel (0) target = $region37
  $region36: #{discriminator_forward.7} parent=0 // pred_region
    _
  $region37: #{discriminator_forward.7} parent=0 // pred_fallthru
    _

// kernel: discriminator_forward.6
$region0: #{discriminator_forward.6}
  #allocation0 [shape = 'u32[]', space=smem, size = 0x4, offset = 0x4, fixed_abs, tag = 'smem constant byte address 0x4 - core index']
  #allocation1 [shape = 'u32[72,128]{1,0:T(1,128)}', space=vmem, size = 0x9000, scoped, tag = 'internal scratch']
  %s0 = inlined_call_operand.vmem [shape: bf16[2,32,256], index: 0, kind: input, shape index: {}]
  %s1 = inlined_call_operand.vmem [shape: bf16[4,256,128], index: 1, kind: input, shape index: {}]
  %s2 = inlined_call_operand.vmem [shape: f32[1,128], index: 2, kind: input, shape index: {}]
  %s3 = inlined_call_operand.vmem [shape: f32[2,24,1], index: 3, kind: input, shape index: {}]
  %s4 = inlined_call_operand.vmem [shape: bf16[2,24,128], index: 4, kind: output, shape index: {0}]
  %s5 = inlined_call_operand.vmem [shape: f32[1,1,128], index: 5, kind: output, shape index: {1}]
  %s6 = inlined_call_operand.vmem [shape: f32[1,1,128], index: 6, kind: output, shape index: {2}]
  %7 = xla_tuple %s4, %s5, %s6
  %s8 = sld [smem:[#allocation0]]
  $region42: #{discriminator_forward.6} parent=0
    _
  %s10 = ssub.s32 1, %s8
  %s11 = scalar_select 0, %s10, %s8
  // Predicated region
  $region2: #{discriminator_forward.6} parent=0 // pred_check
    _
  $region3: #{discriminator_forward.6} parent=0 // pred_check_branch
    %13 = sbr.rel (0) target = $region5
  $region4: #{discriminator_forward.6} parent=0 // pred_region
    _
  $region5: #{discriminator_forward.6} parent=0 // pred_fallthru
    _
  // Predicated region
  $region6: #{discriminator_forward.6} parent=0 // pred_check
    _
  $region7: #{discriminator_forward.6} parent=0 // pred_check_branch
    %15 = sbr.rel (0) target = $region9
  $region8: #{discriminator_forward.6} parent=0 // pred_region
    _
  $region9: #{discriminator_forward.6} parent=0 // pred_fallthru
    _
  // Predicated region
  $region10: #{discriminator_forward.6} parent=0 // pred_check
    _
  $region11: #{discriminator_forward.6} parent=0 // pred_check_branch
    %17 = sbr.rel (0) target = $region13
  $region12: #{discriminator_forward.6} parent=0 // pred_region
    _
  $region13: #{discriminator_forward.6} parent=0 // pred_fallthru
    _
  // Predicated region
  $region14: #{discriminator_forward.6} parent=0 // pred_check
    _
  $region15: #{discriminator_forward.6} parent=0 // pred_check_branch
    %19 = sbr.rel (0) target = $region17
  $region16: #{discriminator_forward.6} parent=0 // pred_region
    _
  $region17: #{discriminator_forward.6} parent=0 // pred_fallthru
    _
  %v20 = vld [vmem:[%s0] sm:$0xff]
  %v21 = vld [vmem:[%s0 + $0x8] sm:$0xff]
  %v22 = vld [vmem:[%s0 + $0x10] sm:$0xff]
  %v23 = vld [vmem:[%s0 + $0x18] sm:$0xff]
  %v24 = vld [vmem:[%s1] sm:$0xf]
  %v25 = vld [vmem:[%s1 + $0x4] sm:$0xf]
  %v26 = vld [vmem:[%s1 + $0x8] sm:$0xf]
  %v27 = vld [vmem:[%s1 + $0xc] sm:$0xf]
  %v28 = vld [vmem:[%s1 + $0x10] sm:$0xf]
  %v29 = vld [vmem:[%s1 + $0x14] sm:$0xf]
  %v30 = vld [vmem:[%s1 + $0x18] sm:$0xf]
  %v31 = vld [vmem:[%s1 + $0x1c] sm:$0xf]
  %v32 = vld [vmem:[%s1 + $0x20] sm:$0xf]
  %v33 = vld [vmem:[%s1 + $0x24] sm:$0xf]
  %v34 = vld [vmem:[%s1 + $0x28] sm:$0xf]
  %v35 = vld [vmem:[%s1 + $0x2c] sm:$0xf]
  %v36 = vld [vmem:[%s1 + $0x30] sm:$0xf]
  %v37 = vld [vmem:[%s1 + $0x34] sm:$0xf]
  %v38 = vld [vmem:[%s1 + $0x38] sm:$0xf]
  %v39 = vld [vmem:[%s1 + $0x3c] sm:$0xf]
  %v40 = vld [vmem:[%s1 + $0x40] sm:$0xf]
  %v41 = vld [vmem:[%s1 + $0x44] sm:$0xf]
  %v42 = vld [vmem:[%s1 + $0x48] sm:$0xf]
  %v43 = vld [vmem:[%s1 + $0x4c] sm:$0xf]
  %v44 = vld [vmem:[%s1 + $0x50] sm:$0xf]
  %v45 = vld [vmem:[%s1 + $0x54] sm:$0xf]
  %v46 = vld [vmem:[%s1 + $0x58] sm:$0xf]
  %v47 = vld [vmem:[%s1 + $0x5c] sm:$0xf]
  %v48 = vld [vmem:[%s1 + $0x60] sm:$0xf]
  %v49 = vld [vmem:[%s1 + $0x64] sm:$0xf]
  %v50 = vld [vmem:[%s1 + $0x68] sm:$0xf]
  %v51 = vld [vmem:[%s1 + $0x6c] sm:$0xf]
  %v52 = vld [vmem:[%s1 + $0x70] sm:$0xf]
  %v53 = vld [vmem:[%s1 + $0x74] sm:$0xf]
  %v54 = vld [vmem:[%s1 + $0x78] sm:$0xf]
  %v55 = vld [vmem:[%s1 + $0x7c] sm:$0xf]
  %s56 = scalar_lea.vmem %s1, 128
  %v57 = vld [vmem:[%s56] sm:$0xf]
  %v58 = vld [vmem:[%s56 + $0x4] sm:$0xf]
  %v59 = vld [vmem:[%s56 + $0x8] sm:$0xf]
  %v60 = vld [vmem:[%s56 + $0xc] sm:$0xf]
  %v61 = vld [vmem:[%s56 + $0x10] sm:$0xf]
  %v62 = vld [vmem:[%s56 + $0x14] sm:$0xf]
  %v63 = vld [vmem:[%s56 + $0x18] sm:$0xf]
  %v64 = vld [vmem:[%s56 + $0x1c] sm:$0xf]
  %v65 = vld [vmem:[%s56 + $0x20] sm:$0xf]
  %v66 = vld [vmem:[%s56 + $0x24] sm:$0xf]
  %v67 = vld [vmem:[%s56 + $0x28] sm:$0xf]
  %v68 = vld [vmem:[%s56 + $0x2c] sm:$0xf]
  %v69 = vld [vmem:[%s56 + $0x30] sm:$0xf]
  %v70 = vld [vmem:[%s56 + $0x34] sm:$0xf]
  %v71 = vld [vmem:[%s56 + $0x38] sm:$0xf]
  %v72 = vld [vmem:[%s56 + $0x3c] sm:$0xf]
  %v73 = vld [vmem:[%s56 + $0x40] sm:$0xf]
  %v74 = vld [vmem:[%s56 + $0x44] sm:$0xf]
  %v75 = vld [vmem:[%s56 + $0x48] sm:$0xf]
  %v76 = vld [vmem:[%s56 + $0x4c] sm:$0xf]
  %v77 = vld [vmem:[%s56 + $0x50] sm:$0xf]
  %v78 = vld [vmem:[%s56 + $0x54] sm:$0xf]
  %v79 = vld [vmem:[%s56 + $0x58] sm:$0xf]
  %v80 = vld [vmem:[%s56 + $0x5c] sm:$0xf]
  %v81 = vld [vmem:[%s56 + $0x60] sm:$0xf]
  %v82 = vld [vmem:[%s56 + $0x64] sm:$0xf]
  %v83 = vld [vmem:[%s56 + $0x68] sm:$0xf]
  %v84 = vld [vmem:[%s56 + $0x6c] sm:$0xf]
  %v85 = vld [vmem:[%s56 + $0x70] sm:$0xf]
  %v86 = vld [vmem:[%s56 + $0x74] sm:$0xf]
  %v87 = vld [vmem:[%s56 + $0x78] sm:$0xf]
  %v88 = vld [vmem:[%s56 + $0x7c] sm:$0xf]
  %v93 = vunpack.c.l.b16 %v20
  %v94 = vunpack.c.h.b16 %v20
  %v95 = vunpack.c.l.b16 %v21
  %v96 = vunpack.c.h.b16 %v21
  %v97 = vunpack.c.l.b16 %v22
  %v98 = vunpack.c.h.b16 %v22
  %v99 = vunpack.c.l.b16 %v23
  %v100 = vunpack.c.h.b16 %v23
  %v101 = vpack.c.b16 %v95, %v93
  %v102 = vpack.c.b16 %v96, %v94
  %v103 = vpack.c.b16 %v99, %v97
  %v104 = vpack.c.b16 %v100, %v98
  %vm105 = vsmask.f32 7424
  %v107 = vshrl.u32 %v101, 16
  %v109 = vshll.u32 %v101, 16
  %v111 = vrot.slane %v109, 1
  %v112 = vor.u32 %v107, %v111
  %v114 = vshll.u32 %v103, 16
  %v116 = vrot.slane %v114, 1
  %v117 = vsel %vm105, %v112, %v116
  %v119 = vshrl.u32 %v102, 16
  %v121 = vshll.u32 %v102, 16
  %v123 = vrot.slane %v121, 1
  %v124 = vor.u32 %v119, %v123
  %v126 = vshll.u32 %v104, 16
  %v128 = vrot.slane %v126, 1
  %v129 = vsel %vm105, %v124, %v128
  %v130 = vshrl.u32 %v103, 16
  %v132 = vor.u32 %v130, %v116
  %v133 = vshrl.u32 %v104, 16
  %v135 = vor.u32 %v133, %v128
  %v172 = vunpack.c.l.b16 %v57
  %v173 = vunpack.c.l.b16 %v58
  %v174 = vunpack.c.l.b16 %v59
  %v175 = vunpack.c.l.b16 %v60
  %v176 = vunpack.c.l.b16 %v61
  %v177 = vunpack.c.l.b16 %v62
  %v178 = vunpack.c.l.b16 %v63
  %v179 = vunpack.c.l.b16 %v64
  %v180 = vunpack.c.l.b16 %v65
  %v181 = vunpack.c.l.b16 %v66
  %v182 = vunpack.c.l.b16 %v67
  %v183 = vunpack.c.l.b16 %v68
  %v184 = vunpack.c.l.b16 %v69
  %v185 = vunpack.c.l.b16 %v70
  %v186 = vunpack.c.l.b16 %v71
  %v187 = vunpack.c.l.b16 %v72
  %v188 = vunpack.c.l.b16 %v73
  %v189 = vunpack.c.l.b16 %v74
  %v190 = vunpack.c.l.b16 %v75
  %v191 = vunpack.c.l.b16 %v76
  %v192 = vunpack.c.l.b16 %v77
  %v193 = vunpack.c.l.b16 %v78
  %v194 = vunpack.c.l.b16 %v79
  %v195 = vunpack.c.l.b16 %v80
  %v196 = vunpack.c.l.b16 %v81
  %v197 = vunpack.c.l.b16 %v82
  %v198 = vunpack.c.l.b16 %v83
  %v199 = vunpack.c.l.b16 %v84
  %v200 = vunpack.c.l.b16 %v85
  %v201 = vunpack.c.l.b16 %v86
  %v202 = vunpack.c.l.b16 %v87
  %v203 = vunpack.c.l.b16 %v88
  %v204 = vpack.c.b16 %v173, %v172
  %v205 = vpack.c.b16 %v175, %v174
  %v206 = vpack.c.b16 %v177, %v176
  %v207 = vpack.c.b16 %v179, %v178
  %v208 = vpack.c.b16 %v181, %v180
  %v209 = vpack.c.b16 %v183, %v182
  %v210 = vpack.c.b16 %v185, %v184
  %v211 = vpack.c.b16 %v187, %v186
  %v212 = vpack.c.b16 %v189, %v188
  %v213 = vpack.c.b16 %v191, %v190
  %v214 = vpack.c.b16 %v193, %v192
  %v215 = vpack.c.b16 %v195, %v194
  %v216 = vpack.c.b16 %v197, %v196
  %v217 = vpack.c.b16 %v199, %v198
  %v218 = vpack.c.b16 %v201, %v200
  %v219 = vpack.c.b16 %v203, %v202
  %236 = vmatpush.bf16.msra.mxu0 %v211
  %237 = vmatpush.bf16.msra.mxu0 %v210
  %238 = vmatpush.bf16.msra.mxu0 %v209
  %239 = vmatpush.bf16.msra.mxu0 %v208
  %240 = vmatpush.bf16.msra.mxu0 %v207
  %241 = vmatpush.bf16.msra.mxu0 %v206
  %242 = vmatpush.bf16.msra.mxu0 %v205
  %243 = vmatpush.bf16.msra.mxu0 %v204
  %244 = vmatmul.bf16.gmra.mxu0 %v117
  %v245 = vpop.f32.mrf.mxu0
  %v246 = vadd.f32 0.0, %v245
  %v247 = vpop.f32.mrf.mxu0
  %v248 = vadd.f32 0.0, %v247
  %249 = vmatmul.bf16.gmra.mxu0 %v132
  %v250 = vpop.f32.mrf.mxu0
  %v251 = vadd.f32 0.0, %v250
  %v252 = vpop.f32.mrf.mxu0
  %253 = vdwg.mxu0
  %254 = vmatpush.bf16.msra.mxu0 %v219
  %255 = vmatpush.bf16.msra.mxu0 %v218
  %256 = vmatpush.bf16.msra.mxu0 %v217
  %257 = vmatpush.bf16.msra.mxu0 %v216
  %258 = vmatpush.bf16.msra.mxu0 %v215
  %259 = vmatpush.bf16.msra.mxu0 %v214
  %260 = vmatpush.bf16.msra.mxu0 %v213
  %261 = vmatpush.bf16.msra.mxu0 %v212
  %262 = vmatmul.bf16.gmra.mxu0 %v129
  %v263 = vpop.f32.mrf.mxu0
  %v264 = vadd.f32 %v246, %v263
  %v265 = vpop.f32.mrf.mxu0
  %v266 = vadd.f32 %v248, %v265
  %267 = vmatmul.bf16.gmra.mxu0 %v135
  %v268 = vpop.f32.mrf.mxu0
  %v269 = vadd.f32 %v251, %v268
  %v270 = vpop.f32.mrf.mxu0
  %271 = vdwg.mxu0
  %v272 = vpack.c.b16 %v97, %v97
  %v273 = vpack.c.b16 %v98, %v98
  %v310 = vunpack.c.l.b16 %v24
  %v311 = vunpack.c.l.b16 %v25
  %v312 = vunpack.c.l.b16 %v26
  %v313 = vunpack.c.l.b16 %v27
  %v314 = vunpack.c.l.b16 %v28
  %v315 = vunpack.c.l.b16 %v29
  %v316 = vunpack.c.l.b16 %v30
  %v317 = vunpack.c.l.b16 %v31
  %v318 = vunpack.c.l.b16 %v32
  %v319 = vunpack.c.l.b16 %v33
  %v320 = vunpack.c.l.b16 %v34
  %v321 = vunpack.c.l.b16 %v35
  %v322 = vunpack.c.l.b16 %v36
  %v323 = vunpack.c.l.b16 %v37
  %v324 = vunpack.c.l.b16 %v38
  %v325 = vunpack.c.l.b16 %v39
  %v326 = vunpack.c.l.b16 %v40
  %v327 = vunpack.c.l.b16 %v41
  %v328 = vunpack.c.l.b16 %v42
  %v329 = vunpack.c.l.b16 %v43
  %v330 = vunpack.c.l.b16 %v44
  %v331 = vunpack.c.l.b16 %v45
  %v332 = vunpack.c.l.b16 %v46
  %v333 = vunpack.c.l.b16 %v47
  %v334 = vunpack.c.l.b16 %v48
  %v335 = vunpack.c.l.b16 %v49
  %v336 = vunpack.c.l.b16 %v50
  %v337 = vunpack.c.l.b16 %v51
  %v338 = vunpack.c.l.b16 %v52
  %v339 = vunpack.c.l.b16 %v53
  %v340 = vunpack.c.l.b16 %v54
  %v341 = vunpack.c.l.b16 %v55
  %v342 = vpack.c.b16 %v311, %v310
  %v343 = vpack.c.b16 %v313, %v312
  %v344 = vpack.c.b16 %v315, %v314
  %v345 = vpack.c.b16 %v317, %v316
  %v346 = vpack.c.b16 %v319, %v318
  %v347 = vpack.c.b16 %v321, %v320
  %v348 = vpack.c.b16 %v323, %v322
  %v349 = vpack.c.b16 %v325, %v324
  %v350 = vpack.c.b16 %v327, %v326
  %v351 = vpack.c.b16 %v329, %v328
  %v352 = vpack.c.b16 %v331, %v330
  %v353 = vpack.c.b16 %v333, %v332
  %v354 = vpack.c.b16 %v335, %v334
  %v355 = vpack.c.b16 %v337, %v336
  %v356 = vpack.c.b16 %v339, %v338
  %v357 = vpack.c.b16 %v341, %v340
  %374 = vmatpush.bf16.msra.mxu0 %v349
  %375 = vmatpush.bf16.msra.mxu0 %v348
  %376 = vmatpush.bf16.msra.mxu0 %v347
  %377 = vmatpush.bf16.msra.mxu0 %v346
  %378 = vmatpush.bf16.msra.mxu0 %v345
  %379 = vmatpush.bf16.msra.mxu0 %v344
  %380 = vmatpush.bf16.msra.mxu0 %v343
  %381 = vmatpush.bf16.msra.mxu0 %v342
  %382 = vmatmul.bf16.gmra.mxu0 %v101
  %v383 = vpop.f32.mrf.mxu0
  %v384 = vadd.f32 %v264, %v383
  %v385 = vpop.f32.mrf.mxu0
  %v386 = vadd.f32 %v266, %v385
  %387 = vmatmul.bf16.gmra.mxu0 %v272
  %v388 = vpop.f32.mrf.mxu0
  %v389 = vadd.f32 %v269, %v388
  %v390 = vpop.f32.mrf.mxu0
  %391 = vdwg.mxu0
  %392 = vmatpush.bf16.msra.mxu0 %v357
  %393 = vmatpush.bf16.msra.mxu0 %v356
  %394 = vmatpush.bf16.msra.mxu0 %v355
  %395 = vmatpush.bf16.msra.mxu0 %v354
  %396 = vmatpush.bf16.msra.mxu0 %v353
  %397 = vmatpush.bf16.msra.mxu0 %v352
  %398 = vmatpush.bf16.msra.mxu0 %v351
  %399 = vmatpush.bf16.msra.mxu0 %v350
  %400 = vmatmul.bf16.gmra.mxu0 %v102
  %v401 = vpop.f32.mrf.mxu0
  %v402 = vadd.f32 %v384, %v401
  %v403 = vpop.f32.mrf.mxu0
  %v404 = vadd.f32 %v386, %v403
  %405 = vmatmul.bf16.gmra.mxu0 %v273
  %v406 = vpop.f32.mrf.mxu0
  %v407 = vadd.f32 %v389, %v406
  %v408 = vpop.f32.mrf.mxu0
  %409 = vdwg.mxu0
  %s410 = scalar_lea.vmem %s1, 256
  %v411 = vld [vmem:[%s410] sm:$0xf]
  %v412 = vld [vmem:[%s410 + $0x4] sm:$0xf]
  %v413 = vld [vmem:[%s410 + $0x8] sm:$0xf]
  %v414 = vld [vmem:[%s410 + $0xc] sm:$0xf]
  %v415 = vld [vmem:[%s410 + $0x10] sm:$0xf]
  %v416 = vld [vmem:[%s410 + $0x14] sm:$0xf]
  %v417 = vld [vmem:[%s410 + $0x18] sm:$0xf]
  %v418 = vld [vmem:[%s410 + $0x1c] sm:$0xf]
  %v419 = vld [vmem:[%s410 + $0x20] sm:$0xf]
  %v420 = vld [vmem:[%s410 + $0x24] sm:$0xf]
  %v421 = vld [vmem:[%s410 + $0x28] sm:$0xf]
  %v422 = vld [vmem:[%s410 + $0x2c] sm:$0xf]
  %v423 = vld [vmem:[%s410 + $0x30] sm:$0xf]
  %v424 = vld [vmem:[%s410 + $0x34] sm:$0xf]
  %v425 = vld [vmem:[%s410 + $0x38] sm:$0xf]
  %v426 = vld [vmem:[%s410 + $0x3c] sm:$0xf]
  %v427 = vld [vmem:[%s410 + $0x40] sm:$0xf]
  %v428 = vld [vmem:[%s410 + $0x44] sm:$0xf]
  %v429 = vld [vmem:[%s410 + $0x48] sm:$0xf]
  %v430 = vld [vmem:[%s410 + $0x4c] sm:$0xf]
  %v431 = vld [vmem:[%s410 + $0x50] sm:$0xf]
  %v432 = vld [vmem:[%s410 + $0x54] sm:$0xf]
  %v433 = vld [vmem:[%s410 + $0x58] sm:$0xf]
  %v434 = vld [vmem:[%s410 + $0x5c] sm:$0xf]
  %v435 = vld [vmem:[%s410 + $0x60] sm:$0xf]
  %v436 = vld [vmem:[%s410 + $0x64] sm:$0xf]
  %v437 = vld [vmem:[%s410 + $0x68] sm:$0xf]
  %v438 = vld [vmem:[%s410 + $0x6c] sm:$0xf]
  %v439 = vld [vmem:[%s410 + $0x70] sm:$0xf]
  %v440 = vld [vmem:[%s410 + $0x74] sm:$0xf]
  %v441 = vld [vmem:[%s410 + $0x78] sm:$0xf]
  %v442 = vld [vmem:[%s410 + $0x7c] sm:$0xf]
  %vm443 = vsmask.f32 5376
  %v444 = vrot.slane %v107, 2
  %v445 = vrot.slane %v109, 3
  %v446 = vor.u32 %v444, %v445
  %v447 = vrot.slane %v130, 2
  %v448 = vrot.slane %v114, 3
  %v449 = vor.u32 %v447, %v448
  %v450 = vsel %vm443, %v446, %v449
  %v451 = vrot.slane %v119, 2
  %v452 = vrot.slane %v121, 3
  %v453 = vor.u32 %v451, %v452
  %v454 = vrot.slane %v133, 2
  %v455 = vrot.slane %v126, 3
  %v456 = vor.u32 %v454, %v455
  %v457 = vsel %vm443, %v453, %v456
  %v494 = vunpack.c.l.b16 %v411
  %v495 = vunpack.c.l.b16 %v412
  %v496 = vunpack.c.l.b16 %v413
  %v497 = vunpack.c.l.b16 %v414
  %v498 = vunpack.c.l.b16 %v415
  %v499 = vunpack.c.l.b16 %v416
  %v500 = vunpack.c.l.b16 %v417
  %v501 = vunpack.c.l.b16 %v418
  %v502 = vunpack.c.l.b16 %v419
  %v503 = vunpack.c.l.b16 %v420
  %v504 = vunpack.c.l.b16 %v421
  %v505 = vunpack.c.l.b16 %v422
  %v506 = vunpack.c.l.b16 %v423
  %v507 = vunpack.c.l.b16 %v424
  %v508 = vunpack.c.l.b16 %v425
  %v509 = vunpack.c.l.b16 %v426
  %v510 = vunpack.c.l.b16 %v427
  %v511 = vunpack.c.l.b16 %v428
  %v512 = vunpack.c.l.b16 %v429
  %v513 = vunpack.c.l.b16 %v430
  %v514 = vunpack.c.l.b16 %v431
  %v515 = vunpack.c.l.b16 %v432
  %v516 = vunpack.c.l.b16 %v433
  %v517 = vunpack.c.l.b16 %v434
  %v518 = vunpack.c.l.b16 %v435
  %v519 = vunpack.c.l.b16 %v436
  %v520 = vunpack.c.l.b16 %v437
  %v521 = vunpack.c.l.b16 %v438
  %v522 = vunpack.c.l.b16 %v439
  %v523 = vunpack.c.l.b16 %v440
  %v524 = vunpack.c.l.b16 %v441
  %v525 = vunpack.c.l.b16 %v442
  %v526 = vpack.c.b16 %v495, %v494
  %v527 = vpack.c.b16 %v497, %v496
  %v528 = vpack.c.b16 %v499, %v498
  %v529 = vpack.c.b16 %v501, %v500
  %v530 = vpack.c.b16 %v503, %v502
  %v531 = vpack.c.b16 %v505, %v504
  %v532 = vpack.c.b16 %v507, %v506
  %v533 = vpack.c.b16 %v509, %v508
  %v534 = vpack.c.b16 %v511, %v510
  %v535 = vpack.c.b16 %v513, %v512
  %v536 = vpack.c.b16 %v515, %v514
  %v537 = vpack.c.b16 %v517, %v516
  %v538 = vpack.c.b16 %v519, %v518
  %v539 = vpack.c.b16 %v521, %v520
  %v540 = vpack.c.b16 %v523, %v522
  %v541 = vpack.c.b16 %v525, %v524
  %558 = vmatpush.bf16.msra.mxu0 %v533
  %559 = vmatpush.bf16.msra.mxu0 %v532
  %560 = vmatpush.bf16.msra.mxu0 %v531
  %561 = vmatpush.bf16.msra.mxu0 %v530
  %562 = vmatpush.bf16.msra.mxu0 %v529
  %563 = vmatpush.bf16.msra.mxu0 %v528
  %564 = vmatpush.bf16.msra.mxu0 %v527
  %565 = vmatpush.bf16.msra.mxu0 %v526
  %566 = vmatmul.bf16.gmra.mxu0 %v450
  %v567 = vpop.f32.mrf.mxu0
  %v568 = vadd.f32 0.0, %v567
  %v569 = vpop.f32.mrf.mxu0
  %v570 = vadd.f32 0.0, %v569
  %571 = vmatmul.bf16.gmra.mxu0 %v449
  %v572 = vpop.f32.mrf.mxu0
  %v573 = vadd.f32 0.0, %v572
  %v574 = vpop.f32.mrf.mxu0
  %575 = vdwg.mxu0
  %576 = vmatpush.bf16.msra.mxu0 %v541
  %577 = vmatpush.bf16.msra.mxu0 %v540
  %578 = vmatpush.bf16.msra.mxu0 %v539
  %579 = vmatpush.bf16.msra.mxu0 %v538
  %580 = vmatpush.bf16.msra.mxu0 %v537
  %581 = vmatpush.bf16.msra.mxu0 %v536
  %582 = vmatpush.bf16.msra.mxu0 %v535
  %583 = vmatpush.bf16.msra.mxu0 %v534
  %584 = vmatmul.bf16.gmra.mxu0 %v457
  %v585 = vpop.f32.mrf.mxu0
  %v586 = vadd.f32 %v568, %v585
  %v587 = vpop.f32.mrf.mxu0
  %v588 = vadd.f32 %v570, %v587
  %589 = vmatmul.bf16.gmra.mxu0 %v456
  %v590 = vpop.f32.mrf.mxu0
  %v591 = vadd.f32 %v573, %v590
  %v592 = vpop.f32.mrf.mxu0
  %593 = vdwg.mxu0
  %v594 = vadd.f32 %v402, %v586
  %v595 = vadd.f32 %v404, %v588
  %v596 = vadd.f32 %v407, %v591
  %s597 = scalar_lea.vmem %s1, 384
  %v598 = vld [vmem:[%s597] sm:$0xf]
  %v599 = vld [vmem:[%s597 + $0x4] sm:$0xf]
  %v600 = vld [vmem:[%s597 + $0x8] sm:$0xf]
  %v601 = vld [vmem:[%s597 + $0xc] sm:$0xf]
  %v602 = vld [vmem:[%s597 + $0x10] sm:$0xf]
  %v603 = vld [vmem:[%s597 + $0x14] sm:$0xf]
  %v604 = vld [vmem:[%s597 + $0x18] sm:$0xf]
  %v605 = vld [vmem:[%s597 + $0x1c] sm:$0xf]
  %v606 = vld [vmem:[%s597 + $0x20] sm:$0xf]
  %v607 = vld [vmem:[%s597 + $0x24] sm:$0xf]
  %v608 = vld [vmem:[%s597 + $0x28] sm:$0xf]
  %v609 = vld [vmem:[%s597 + $0x2c] sm:$0xf]
  %v610 = vld [vmem:[%s597 + $0x30] sm:$0xf]
  %v611 = vld [vmem:[%s597 + $0x34] sm:$0xf]
  %v612 = vld [vmem:[%s597 + $0x38] sm:$0xf]
  %v613 = vld [vmem:[%s597 + $0x3c] sm:$0xf]
  %v614 = vld [vmem:[%s597 + $0x40] sm:$0xf]
  %v615 = vld [vmem:[%s597 + $0x44] sm:$0xf]
  %v616 = vld [vmem:[%s597 + $0x48] sm:$0xf]
  %v617 = vld [vmem:[%s597 + $0x4c] sm:$0xf]
  %v618 = vld [vmem:[%s597 + $0x50] sm:$0xf]
  %v619 = vld [vmem:[%s597 + $0x54] sm:$0xf]
  %v620 = vld [vmem:[%s597 + $0x58] sm:$0xf]
  %v621 = vld [vmem:[%s597 + $0x5c] sm:$0xf]
  %v622 = vld [vmem:[%s597 + $0x60] sm:$0xf]
  %v623 = vld [vmem:[%s597 + $0x64] sm:$0xf]
  %v624 = vld [vmem:[%s597 + $0x68] sm:$0xf]
  %v625 = vld [vmem:[%s597 + $0x6c] sm:$0xf]
  %v626 = vld [vmem:[%s597 + $0x70] sm:$0xf]
  %v627 = vld [vmem:[%s597 + $0x74] sm:$0xf]
  %v628 = vld [vmem:[%s597 + $0x78] sm:$0xf]
  %v629 = vld [vmem:[%s597 + $0x7c] sm:$0xf]
  %vm630 = vcmask 1044480
  %v631 = vrot.slane %v101, 3
  %v632 = vrot.slane %v103, 3
  %v633 = vsel %vm630, %v631, %v632
  %v634 = vrot.slane %v102, 3
  %v635 = vrot.slane %v104, 3
  %v636 = vsel %vm630, %v634, %v635
  %v673 = vunpack.c.l.b16 %v598
  %v674 = vunpack.c.l.b16 %v599
  %v675 = vunpack.c.l.b16 %v600
  %v676 = vunpack.c.l.b16 %v601
  %v677 = vunpack.c.l.b16 %v602
  %v678 = vunpack.c.l.b16 %v603
  %v679 = vunpack.c.l.b16 %v604
  %v680 = vunpack.c.l.b16 %v605
  %v681 = vunpack.c.l.b16 %v606
  %v682 = vunpack.c.l.b16 %v607
  %v683 = vunpack.c.l.b16 %v608
  %v684 = vunpack.c.l.b16 %v609
  %v685 = vunpack.c.l.b16 %v610
  %v686 = vunpack.c.l.b16 %v611
  %v687 = vunpack.c.l.b16 %v612
  %v688 = vunpack.c.l.b16 %v613
  %v689 = vunpack.c.l.b16 %v614
  %v690 = vunpack.c.l.b16 %v615
  %v691 = vunpack.c.l.b16 %v616
  %v692 = vunpack.c.l.b16 %v617
  %v693 = vunpack.c.l.b16 %v618
  %v694 = vunpack.c.l.b16 %v619
  %v695 = vunpack.c.l.b16 %v620
  %v696 = vunpack.c.l.b16 %v621
  %v697 = vunpack.c.l.b16 %v622
  %v698 = vunpack.c.l.b16 %v623
  %v699 = vunpack.c.l.b16 %v624
  %v700 = vunpack.c.l.b16 %v625
  %v701 = vunpack.c.l.b16 %v626
  %v702 = vunpack.c.l.b16 %v627
  %v703 = vunpack.c.l.b16 %v628
  %v704 = vunpack.c.l.b16 %v629
  %v705 = vpack.c.b16 %v674, %v673
  %v706 = vpack.c.b16 %v676, %v675
  %v707 = vpack.c.b16 %v678, %v677
  %v708 = vpack.c.b16 %v680, %v679
  %v709 = vpack.c.b16 %v682, %v681
  %v710 = vpack.c.b16 %v684, %v683
  %v711 = vpack.c.b16 %v686, %v685
  %v712 = vpack.c.b16 %v688, %v687
  %v713 = vpack.c.b16 %v690, %v689
  %v714 = vpack.c.b16 %v692, %v691
  %v715 = vpack.c.b16 %v694, %v693
  %v716 = vpack.c.b16 %v696, %v695
  %v717 = vpack.c.b16 %v698, %v697
  %v718 = vpack.c.b16 %v700, %v699
  %v719 = vpack.c.b16 %v702, %v701
  %v720 = vpack.c.b16 %v704, %v703
  %737 = vmatpush.bf16.msra.mxu0 %v712
  %738 = vmatpush.bf16.msra.mxu0 %v711
  %739 = vmatpush.bf16.msra.mxu0 %v710
  %740 = vmatpush.bf16.msra.mxu0 %v709
  %741 = vmatpush.bf16.msra.mxu0 %v708
  %742 = vmatpush.bf16.msra.mxu0 %v707
  %743 = vmatpush.bf16.msra.mxu0 %v706
  %744 = vmatpush.bf16.msra.mxu0 %v705
  %745 = vmatmul.bf16.gmra.mxu0 %v633
  %v746 = vpop.f32.mrf.mxu0
  %v747 = vadd.f32 0.0, %v746
  %v748 = vpop.f32.mrf.mxu0
  %v749 = vadd.f32 0.0, %v748
  %750 = vmatmul.bf16.gmra.mxu0 %v632
  %v751 = vpop.f32.mrf.mxu0
  %v752 = vadd.f32 0.0, %v751
  %v753 = vpop.f32.mrf.mxu0
  %754 = vdwg.mxu0
  %755 = vmatpush.bf16.msra.mxu0 %v720
  %756 = vmatpush.bf16.msra.mxu0 %v719
  %757 = vmatpush.bf16.msra.mxu0 %v718
  %758 = vmatpush.bf16.msra.mxu0 %v717
  %759 = vmatpush.bf16.msra.mxu0 %v716
  %760 = vmatpush.bf16.msra.mxu0 %v715
  %761 = vmatpush.bf16.msra.mxu0 %v714
  %762 = vmatpush.bf16.msra.mxu0 %v713
  %763 = vmatmul.bf16.gmra.mxu0 %v636
  %v764 = vpop.f32.mrf.mxu0
  %v765 = vadd.f32 %v747, %v764
  %v766 = vpop.f32.mrf.mxu0
  %v767 = vadd.f32 %v749, %v766
  %768 = vmatmul.bf16.gmra.mxu0 %v635
  %v769 = vpop.f32.mrf.mxu0
  %v770 = vadd.f32 %v752, %v769
  %v771 = vpop.f32.mrf.mxu0
  %772 = vdwg.mxu0
  %v773 = vadd.f32 %v594, %v765
  %v774 = vadd.f32 %v595, %v767
  %v775 = vadd.f32 %v596, %v770
  %v776 = vld [vmem:[%s2] sm:$0x1]
  %v778 = vperm.slane %v776, 0
  %v780 = vadd.f32 %v773, %v778
  %v781 = vadd.f32 %v774, %v778
  %v782 = vadd.f32 %v775, %v778
  %v783 = vpack.c.bf16 %v780, %v780
  %v784 = vpack.c.bf16 %v781, %v781
  %v785 = vpack.c.bf16 %v782, %v782
  %786 = vst [vmem:[%s4] sm:$0xf] %v783
  %787 = vst [vmem:[%s4 + $0x4] sm:$0xf] %v784
  %788 = vst [vmem:[%s4 + $0x8] sm:$0xf] %v785
  %v789 = vld [vmem:[%s3] sm:$0xff]
  %v790 = vld [vmem:[%s3 + $0x8] sm:$0xff]
  %v791 = vld [vmem:[%s3 + $0x10] sm:$0xff]
  %793 = vset.pattern.permute.xlu0 0
  %794 = vperm.xlu0 %793, %v789
  %v795 = vpop.permute.xlu0 %794
  %798 = vset.pattern.permute.xlu0 0
  %799 = vperm.xlu0 %798, %v790
  %v800 = vpop.permute.xlu0 %799
  %803 = vset.pattern.permute.xlu0 0
  %804 = vperm.xlu0 %803, %v791
  %v805 = vpop.permute.xlu0 %804
  %v807 = vmul.f32 %v780, %v795
  %v808 = vmul.f32 %v781, %v800
  %v809 = vmul.f32 %v782, %v805
  %v810 = vadd.f32 %v807, %v808
  %v811 = vadd.f32 %v810, %v809
  %v812 = vrot.slane %v811, 4
  %v813 = vadd.f32 %v811, %v812
  %v814 = vrot.slane %v813, 2
  %v815 = vadd.f32 %v813, %v814
  %v816 = vrot.slane %v815, 1
  %v817 = vadd.f32 %v815, %v816
  %v818 = vadd.f32 %v817, 0.0
  %v819 = vmul.f32 %v807, %v807
  %v820 = vmul.f32 %v808, %v808
  %v821 = vmul.f32 %v809, %v809
  %v822 = vadd.f32 %v819, %v820
  %v823 = vadd.f32 %v822, %v821
  %v824 = vrot.slane %v823, 4
  %v825 = vadd.f32 %v823, %v824
  %v826 = vrot.slane %v825, 2
  %v827 = vadd.f32 %v825, %v826
  %v828 = vrot.slane %v827, 1
  %v829 = vadd.f32 %v827, %v828
  %v830 = vadd.f32 %v829, 0.0
  %s831 = scalar_lea.vmem %s0, 32
  %v832 = vld [vmem:[%s831] sm:$0xff]
  %v833 = vld [vmem:[%s831 + $0x8] sm:$0xff]
  %v834 = vld [vmem:[%s831 + $0x10] sm:$0xff]
  %v835 = vld [vmem:[%s831 + $0x18] sm:$0xff]
  %v836 = vld [vmem:[%s1] sm:$0xf]
  %v837 = vld [vmem:[%s1 + $0x4] sm:$0xf]
  %v838 = vld [vmem:[%s1 + $0x8] sm:$0xf]
  %v839 = vld [vmem:[%s1 + $0xc] sm:$0xf]
  %v840 = vld [vmem:[%s1 + $0x10] sm:$0xf]
  %v841 = vld [vmem:[%s1 + $0x14] sm:$0xf]
  %v842 = vld [vmem:[%s1 + $0x18] sm:$0xf]
  %v843 = vld [vmem:[%s1 + $0x1c] sm:$0xf]
  %v844 = vld [vmem:[%s1 + $0x20] sm:$0xf]
  %v845 = vld [vmem:[%s1 + $0x24] sm:$0xf]
  %v846 = vld [vmem:[%s1 + $0x28] sm:$0xf]
  %v847 = vld [vmem:[%s1 + $0x2c] sm:$0xf]
  %v848 = vld [vmem:[%s1 + $0x30] sm:$0xf]
  %v849 = vld [vmem:[%s1 + $0x34] sm:$0xf]
  %v850 = vld [vmem:[%s1 + $0x38] sm:$0xf]
  %v851 = vld [vmem:[%s1 + $0x3c] sm:$0xf]
  %v852 = vld [vmem:[%s1 + $0x40] sm:$0xf]
  %v853 = vld [vmem:[%s1 + $0x44] sm:$0xf]
  %v854 = vld [vmem:[%s1 + $0x48] sm:$0xf]
  %v855 = vld [vmem:[%s1 + $0x4c] sm:$0xf]
  %v856 = vld [vmem:[%s1 + $0x50] sm:$0xf]
  %v857 = vld [vmem:[%s1 + $0x54] sm:$0xf]
  %v858 = vld [vmem:[%s1 + $0x58] sm:$0xf]
  %v859 = vld [vmem:[%s1 + $0x5c] sm:$0xf]
  %v860 = vld [vmem:[%s1 + $0x60] sm:$0xf]
  %v861 = vld [vmem:[%s1 + $0x64] sm:$0xf]
  %v862 = vld [vmem:[%s1 + $0x68] sm:$0xf]
  %v863 = vld [vmem:[%s1 + $0x6c] sm:$0xf]
  %v864 = vld [vmem:[%s1 + $0x70] sm:$0xf]
  %v865 = vld [vmem:[%s1 + $0x74] sm:$0xf]
  %v866 = vld [vmem:[%s1 + $0x78] sm:$0xf]
  %v867 = vld [vmem:[%s1 + $0x7c] sm:$0xf]
  %v868 = vld [vmem:[%s56] sm:$0xf]
  %v869 = vld [vmem:[%s56 + $0x4] sm:$0xf]
  %v870 = vld [vmem:[%s56 + $0x8] sm:$0xf]
  %v871 = vld [vmem:[%s56 + $0xc] sm:$0xf]
  %v872 = vld [vmem:[%s56 + $0x10] sm:$0xf]
  %v873 = vld [vmem:[%s56 + $0x14] sm:$0xf]
  %v874 = vld [vmem:[%s56 + $0x18] sm:$0xf]
  %v875 = vld [vmem:[%s56 + $0x1c] sm:$0xf]
  %v876 = vld [vmem:[%s56 + $0x20] sm:$0xf]
  %v877 = vld [vmem:[%s56 + $0x24] sm:$0xf]
  %v878 = vld [vmem:[%s56 + $0x28] sm:$0xf]
  %v879 = vld [vmem:[%s56 + $0x2c] sm:$0xf]
  %v880 = vld [vmem:[%s56 + $0x30] sm:$0xf]
  %v881 = vld [vmem:[%s56 + $0x34] sm:$0xf]
  %v882 = vld [vmem:[%s56 + $0x38] sm:$0xf]
  %v883 = vld [vmem:[%s56 + $0x3c] sm:$0xf]
  %v884 = vld [vmem:[%s56 + $0x40] sm:$0xf]
  %v885 = vld [vmem:[%s56 + $0x44] sm:$0xf]
  %v886 = vld [vmem:[%s56 + $0x48] sm:$0xf]
  %v887 = vld [vmem:[%s56 + $0x4c] sm:$0xf]
  %v888 = vld [vmem:[%s56 + $0x50] sm:$0xf]
  %v889 = vld [vmem:[%s56 + $0x54] sm:$0xf]
  %v890 = vld [vmem:[%s56 + $0x58] sm:$0xf]
  %v891 = vld [vmem:[%s56 + $0x5c] sm:$0xf]
  %v892 = vld [vmem:[%s56 + $0x60] sm:$0xf]
  %v893 = vld [vmem:[%s56 + $0x64] sm:$0xf]
  %v894 = vld [vmem:[%s56 + $0x68] sm:$0xf]
  %v895 = vld [vmem:[%s56 + $0x6c] sm:$0xf]
  %v896 = vld [vmem:[%s56 + $0x70] sm:$0xf]
  %v897 = vld [vmem:[%s56 + $0x74] sm:$0xf]
  %v898 = vld [vmem:[%s56 + $0x78] sm:$0xf]
  %v899 = vld [vmem:[%s56 + $0x7c] sm:$0xf]
  %v904 = vunpack.c.l.b16 %v832
  %v905 = vunpack.c.h.b16 %v832
  %v906 = vunpack.c.l.b16 %v833
  %v907 = vunpack.c.h.b16 %v833
  %v908 = vunpack.c.l.b16 %v834
  %v909 = vunpack.c.h.b16 %v834
  %v910 = vunpack.c.l.b16 %v835
  %v911 = vunpack.c.h.b16 %v835
  %v912 = vpack.c.b16 %v906, %v904
  %v913 = vpack.c.b16 %v907, %v905
  %v914 = vpack.c.b16 %v910, %v908
  %v915 = vpack.c.b16 %v911, %v909
  %v917 = vshrl.u32 %v912, 16
  %v919 = vshll.u32 %v912, 16
  %v921 = vrot.slane %v919, 1
  %v922 = vor.u32 %v917, %v921
  %v924 = vshll.u32 %v914, 16
  %v926 = vrot.slane %v924, 1
  %v927 = vsel %vm105, %v922, %v926
  %v929 = vshrl.u32 %v913, 16
  %v931 = vshll.u32 %v913, 16
  %v933 = vrot.slane %v931, 1
  %v934 = vor.u32 %v929, %v933
  %v936 = vshll.u32 %v915, 16
  %v938 = vrot.slane %v936, 1
  %v939 = vsel %vm105, %v934, %v938
  %v940 = vshrl.u32 %v914, 16
  %v942 = vor.u32 %v940, %v926
  %v943 = vshrl.u32 %v915, 16
  %v945 = vor.u32 %v943, %v938
  %v982 = vunpack.c.l.b16 %v868
  %v983 = vunpack.c.l.b16 %v869
  %v984 = vunpack.c.l.b16 %v870
  %v985 = vunpack.c.l.b16 %v871
  %v986 = vunpack.c.l.b16 %v872
  %v987 = vunpack.c.l.b16 %v873
  %v988 = vunpack.c.l.b16 %v874
  %v989 = vunpack.c.l.b16 %v875
  %v990 = vunpack.c.l.b16 %v876
  %v991 = vunpack.c.l.b16 %v877
  %v992 = vunpack.c.l.b16 %v878
  %v993 = vunpack.c.l.b16 %v879
  %v994 = vunpack.c.l.b16 %v880
  %v995 = vunpack.c.l.b16 %v881
  %v996 = vunpack.c.l.b16 %v882
  %v997 = vunpack.c.l.b16 %v883
  %v998 = vunpack.c.l.b16 %v884
  %v999 = vunpack.c.l.b16 %v885
  %v1000 = vunpack.c.l.b16 %v886
  %v1001 = vunpack.c.l.b16 %v887
  %v1002 = vunpack.c.l.b16 %v888
  %v1003 = vunpack.c.l.b16 %v889
  %v1004 = vunpack.c.l.b16 %v890
  %v1005 = vunpack.c.l.b16 %v891
  %v1006 = vunpack.c.l.b16 %v892
  %v1007 = vunpack.c.l.b16 %v893
  %v1008 = vunpack.c.l.b16 %v894
  %v1009 = vunpack.c.l.b16 %v895
  %v1010 = vunpack.c.l.b16 %v896
  %v1011 = vunpack.c.l.b16 %v897
  %v1012 = vunpack.c.l.b16 %v898
  %v1013 = vunpack.c.l.b16 %v899
  %v1014 = vpack.c.b16 %v983, %v982
  %v1015 = vpack.c.b16 %v985, %v984
  %v1016 = vpack.c.b16 %v987, %v986
  %v1017 = vpack.c.b16 %v989, %v988
  %v1018 = vpack.c.b16 %v991, %v990
  %v1019 = vpack.c.b16 %v993, %v992
  %v1020 = vpack.c.b16 %v995, %v994
  %v1021 = vpack.c.b16 %v997, %v996
  %v1022 = vpack.c.b16 %v999, %v998
  %v1023 = vpack.c.b16 %v1001, %v1000
  %v1024 = vpack.c.b16 %v1003, %v1002
  %v1025 = vpack.c.b16 %v1005, %v1004
  %v1026 = vpack.c.b16 %v1007, %v1006
  %v1027 = vpack.c.b16 %v1009, %v1008
  %v1028 = vpack.c.b16 %v1011, %v1010
  %v1029 = vpack.c.b16 %v1013, %v1012
  %1046 = vmatpush.bf16.msra.mxu0 %v1021
  %1047 = vmatpush.bf16.msra.mxu0 %v1020
  %1048 = vmatpush.bf16.msra.mxu0 %v1019
  %1049 = vmatpush.bf16.msra.mxu0 %v1018
  %1050 = vmatpush.bf16.msra.mxu0 %v1017
  %1051 = vmatpush.bf16.msra.mxu0 %v1016
  %1052 = vmatpush.bf16.msra.mxu0 %v1015
  %1053 = vmatpush.bf16.msra.mxu0 %v1014
  %1054 = vmatmul.bf16.gmra.mxu0 %v927
  %v1055 = vpop.f32.mrf.mxu0
  %v1056 = vadd.f32 0.0, %v1055
  %v1057 = vpop.f32.mrf.mxu0
  %v1058 = vadd.f32 0.0, %v1057
  %1059 = vmatmul.bf16.gmra.mxu0 %v942
  %v1060 = vpop.f32.mrf.mxu0
  %v1061 = vadd.f32 0.0, %v1060
  %v1062 = vpop.f32.mrf.mxu0
  %1063 = vdwg.mxu0
  %1064 = vmatpush.bf16.msra.mxu0 %v1029
  %1065 = vmatpush.bf16.msra.mxu0 %v1028
  %1066 = vmatpush.bf16.msra.mxu0 %v1027
  %1067 = vmatpush.bf16.msra.mxu0 %v1026
  %1068 = vmatpush.bf16.msra.mxu0 %v1025
  %1069 = vmatpush.bf16.msra.mxu0 %v1024
  %1070 = vmatpush.bf16.msra.mxu0 %v1023
  %1071 = vmatpush.bf16.msra.mxu0 %v1022
  %1072 = vmatmul.bf16.gmra.mxu0 %v939
  %v1073 = vpop.f32.mrf.mxu0
  %v1074 = vadd.f32 %v1056, %v1073
  %v1075 = vpop.f32.mrf.mxu0
  %v1076 = vadd.f32 %v1058, %v1075
  %1077 = vmatmul.bf16.gmra.mxu0 %v945
  %v1078 = vpop.f32.mrf.mxu0
  %v1079 = vadd.f32 %v1061, %v1078
  %v1080 = vpop.f32.mrf.mxu0
  %1081 = vdwg.mxu0
  %v1082 = vpack.c.b16 %v908, %v908
  %v1083 = vpack.c.b16 %v909, %v909
  %v1120 = vunpack.c.l.b16 %v836
  %v1121 = vunpack.c.l.b16 %v837
  %v1122 = vunpack.c.l.b16 %v838
  %v1123 = vunpack.c.l.b16 %v839
  %v1124 = vunpack.c.l.b16 %v840
  %v1125 = vunpack.c.l.b16 %v841
  %v1126 = vunpack.c.l.b16 %v842
  %v1127 = vunpack.c.l.b16 %v843
  %v1128 = vunpack.c.l.b16 %v844
  %v1129 = vunpack.c.l.b16 %v845
  %v1130 = vunpack.c.l.b16 %v846
  %v1131 = vunpack.c.l.b16 %v847
  %v1132 = vunpack.c.l.b16 %v848
  %v1133 = vunpack.c.l.b16 %v849
  %v1134 = vunpack.c.l.b16 %v850
  %v1135 = vunpack.c.l.b16 %v851
  %v1136 = vunpack.c.l.b16 %v852
  %v1137 = vunpack.c.l.b16 %v853
  %v1138 = vunpack.c.l.b16 %v854
  %v1139 = vunpack.c.l.b16 %v855
  %v1140 = vunpack.c.l.b16 %v856
  %v1141 = vunpack.c.l.b16 %v857
  %v1142 = vunpack.c.l.b16 %v858
  %v1143 = vunpack.c.l.b16 %v859
  %v1144 = vunpack.c.l.b16 %v860
  %v1145 = vunpack.c.l.b16 %v861
  %v1146 = vunpack.c.l.b16 %v862
  %v1147 = vunpack.c.l.b16 %v863
  %v1148 = vunpack.c.l.b16 %v864
  %v1149 = vunpack.c.l.b16 %v865
  %v1150 = vunpack.c.l.b16 %v866
  %v1151 = vunpack.c.l.b16 %v867
  %v1152 = vpack.c.b16 %v1121, %v1120
  %v1153 = vpack.c.b16 %v1123, %v1122
  %v1154 = vpack.c.b16 %v1125, %v1124
  %v1155 = vpack.c.b16 %v1127, %v1126
  %v1156 = vpack.c.b16 %v1129, %v1128
  %v1157 = vpack.c.b16 %v1131, %v1130
  %v1158 = vpack.c.b16 %v1133, %v1132
  %v1159 = vpack.c.b16 %v1135, %v1134
  %v1160 = vpack.c.b16 %v1137, %v1136
  %v1161 = vpack.c.b16 %v1139, %v1138
  %v1162 = vpack.c.b16 %v1141, %v1140
  %v1163 = vpack.c.b16 %v1143, %v1142
  %v1164 = vpack.c.b16 %v1145, %v1144
  %v1165 = vpack.c.b16 %v1147, %v1146
  %v1166 = vpack.c.b16 %v1149, %v1148
  %v1167 = vpack.c.b16 %v1151, %v1150
  %1184 = vmatpush.bf16.msra.mxu0 %v1159
  %1185 = vmatpush.bf16.msra.mxu0 %v1158
  %1186 = vmatpush.bf16.msra.mxu0 %v1157
  %1187 = vmatpush.bf16.msra.mxu0 %v1156
  %1188 = vmatpush.bf16.msra.mxu0 %v1155
  %1189 = vmatpush.bf16.msra.mxu0 %v1154
  %1190 = vmatpush.bf16.msra.mxu0 %v1153
  %1191 = vmatpush.bf16.msra.mxu0 %v1152
  %1192 = vmatmul.bf16.gmra.mxu0 %v912
  %v1193 = vpop.f32.mrf.mxu0
  %v1194 = vadd.f32 %v1074, %v1193
  %v1195 = vpop.f32.mrf.mxu0
  %v1196 = vadd.f32 %v1076, %v1195
  %1197 = vmatmul.bf16.gmra.mxu0 %v1082
  %v1198 = vpop.f32.mrf.mxu0
  %v1199 = vadd.f32 %v1079, %v1198
  %v1200 = vpop.f32.mrf.mxu0
  %1201 = vdwg.mxu0
  %1202 = vmatpush.bf16.msra.mxu0 %v1167
  %1203 = vmatpush.bf16.msra.mxu0 %v1166
  %1204 = vmatpush.bf16.msra.mxu0 %v1165
  %1205 = vmatpush.bf16.msra.mxu0 %v1164
  %1206 = vmatpush.bf16.msra.mxu0 %v1163
  %1207 = vmatpush.bf16.msra.mxu0 %v1162
  %1208 = vmatpush.bf16.msra.mxu0 %v1161
  %1209 = vmatpush.bf16.msra.mxu0 %v1160
  %1210 = vmatmul.bf16.gmra.mxu0 %v913
  %v1211 = vpop.f32.mrf.mxu0
  %v1212 = vadd.f32 %v1194, %v1211
  %v1213 = vpop.f32.mrf.mxu0
  %v1214 = vadd.f32 %v1196, %v1213
  %1215 = vmatmul.bf16.gmra.mxu0 %v1083
  %v1216 = vpop.f32.mrf.mxu0
  %v1217 = vadd.f32 %v1199, %v1216
  %v1218 = vpop.f32.mrf.mxu0
  %1219 = vdwg.mxu0
  %v1220 = vld [vmem:[%s410] sm:$0xf]
  %v1221 = vld [vmem:[%s410 + $0x4] sm:$0xf]
  %v1222 = vld [vmem:[%s410 + $0x8] sm:$0xf]
  %v1223 = vld [vmem:[%s410 + $0xc] sm:$0xf]
  %v1224 = vld [vmem:[%s410 + $0x10] sm:$0xf]
  %v1225 = vld [vmem:[%s410 + $0x14] sm:$0xf]
  %v1226 = vld [vmem:[%s410 + $0x18] sm:$0xf]
  %v1227 = vld [vmem:[%s410 + $0x1c] sm:$0xf]
  %v1228 = vld [vmem:[%s410 + $0x20] sm:$0xf]
  %v1229 = vld [vmem:[%s410 + $0x24] sm:$0xf]
  %v1230 = vld [vmem:[%s410 + $0x28] sm:$0xf]
  %v1231 = vld [vmem:[%s410 + $0x2c] sm:$0xf]
  %v1232 = vld [vmem:[%s410 + $0x30] sm:$0xf]
  %v1233 = vld [vmem:[%s410 + $0x34] sm:$0xf]
  %v1234 = vld [vmem:[%s410 + $0x38] sm:$0xf]
  %v1235 = vld [vmem:[%s410 + $0x3c] sm:$0xf]
  %v1236 = vld [vmem:[%s410 + $0x40] sm:$0xf]
  %v1237 = vld [vmem:[%s410 + $0x44] sm:$0xf]
  %v1238 = vld [vmem:[%s410 + $0x48] sm:$0xf]
  %v1239 = vld [vmem:[%s410 + $0x4c] sm:$0xf]
  %v1240 = vld [vmem:[%s410 + $0x50] sm:$0xf]
  %v1241 = vld [vmem:[%s410 + $0x54] sm:$0xf]
  %v1242 = vld [vmem:[%s410 + $0x58] sm:$0xf]
  %v1243 = vld [vmem:[%s410 + $0x5c] sm:$0xf]
  %v1244 = vld [vmem:[%s410 + $0x60] sm:$0xf]
  %v1245 = vld [vmem:[%s410 + $0x64] sm:$0xf]
  %v1246 = vld [vmem:[%s410 + $0x68] sm:$0xf]
  %v1247 = vld [vmem:[%s410 + $0x6c] sm:$0xf]
  %v1248 = vld [vmem:[%s410 + $0x70] sm:$0xf]
  %v1249 = vld [vmem:[%s410 + $0x74] sm:$0xf]
  %v1250 = vld [vmem:[%s410 + $0x78] sm:$0xf]
  %v1251 = vld [vmem:[%s410 + $0x7c] sm:$0xf]
  %v1252 = vrot.slane %v917, 2
  %v1253 = vrot.slane %v919, 3
  %v1254 = vor.u32 %v1252, %v1253
  %v1255 = vrot.slane %v940, 2
  %v1256 = vrot.slane %v924, 3
  %v1257 = vor.u32 %v1255, %v1256
  %v1258 = vsel %vm443, %v1254, %v1257
  %v1259 = vrot.slane %v929, 2
  %v1260 = vrot.slane %v931, 3
  %v1261 = vor.u32 %v1259, %v1260
  %v1262 = vrot.slane %v943, 2
  %v1263 = vrot.slane %v936, 3
  %v1264 = vor.u32 %v1262, %v1263
  %v1265 = vsel %vm443, %v1261, %v1264
  %v1302 = vunpack.c.l.b16 %v1220
  %v1303 = vunpack.c.l.b16 %v1221
  %v1304 = vunpack.c.l.b16 %v1222
  %v1305 = vunpack.c.l.b16 %v1223
  %v1306 = vunpack.c.l.b16 %v1224
  %v1307 = vunpack.c.l.b16 %v1225
  %v1308 = vunpack.c.l.b16 %v1226
  %v1309 = vunpack.c.l.b16 %v1227
  %v1310 = vunpack.c.l.b16 %v1228
  %v1311 = vunpack.c.l.b16 %v1229
  %v1312 = vunpack.c.l.b16 %v1230
  %v1313 = vunpack.c.l.b16 %v1231
  %v1314 = vunpack.c.l.b16 %v1232
  %v1315 = vunpack.c.l.b16 %v1233
  %v1316 = vunpack.c.l.b16 %v1234
  %v1317 = vunpack.c.l.b16 %v1235
  %v1318 = vunpack.c.l.b16 %v1236
  %v1319 = vunpack.c.l.b16 %v1237
  %v1320 = vunpack.c.l.b16 %v1238
  %v1321 = vunpack.c.l.b16 %v1239
  %v1322 = vunpack.c.l.b16 %v1240
  %v1323 = vunpack.c.l.b16 %v1241
  %v1324 = vunpack.c.l.b16 %v1242
  %v1325 = vunpack.c.l.b16 %v1243
  %v1326 = vunpack.c.l.b16 %v1244
  %v1327 = vunpack.c.l.b16 %v1245
  %v1328 = vunpack.c.l.b16 %v1246
  %v1329 = vunpack.c.l.b16 %v1247
  %v1330 = vunpack.c.l.b16 %v1248
  %v1331 = vunpack.c.l.b16 %v1249
  %v1332 = vunpack.c.l.b16 %v1250
  %v1333 = vunpack.c.l.b16 %v1251
  %v1334 = vpack.c.b16 %v1303, %v1302
  %v1335 = vpack.c.b16 %v1305, %v1304
  %v1336 = vpack.c.b16 %v1307, %v1306
  %v1337 = vpack.c.b16 %v1309, %v1308
  %v1338 = vpack.c.b16 %v1311, %v1310
  %v1339 = vpack.c.b16 %v1313, %v1312
  %v1340 = vpack.c.b16 %v1315, %v1314
  %v1341 = vpack.c.b16 %v1317, %v1316
  %v1342 = vpack.c.b16 %v1319, %v1318
  %v1343 = vpack.c.b16 %v1321, %v1320
  %v1344 = vpack.c.b16 %v1323, %v1322
  %v1345 = vpack.c.b16 %v1325, %v1324
  %v1346 = vpack.c.b16 %v1327, %v1326
  %v1347 = vpack.c.b16 %v1329, %v1328
  %v1348 = vpack.c.b16 %v1331, %v1330
  %v1349 = vpack.c.b16 %v1333, %v1332
  %1366 = vmatpush.bf16.msra.mxu0 %v1341
  %1367 = vmatpush.bf16.msra.mxu0 %v1340
  %1368 = vmatpush.bf16.msra.mxu0 %v1339
  %1369 = vmatpush.bf16.msra.mxu0 %v1338
  %1370 = vmatpush.bf16.msra.mxu0 %v1337
  %1371 = vmatpush.bf16.msra.mxu0 %v1336
  %1372 = vmatpush.bf16.msra.mxu0 %v1335
  %1373 = vmatpush.bf16.msra.mxu0 %v1334
  %1374 = vmatmul.bf16.gmra.mxu0 %v1258
  %v1375 = vpop.f32.mrf.mxu0
  %v1376 = vadd.f32 0.0, %v1375
  %v1377 = vpop.f32.mrf.mxu0
  %v1378 = vadd.f32 0.0, %v1377
  %1379 = vmatmul.bf16.gmra.mxu0 %v1257
  %v1380 = vpop.f32.mrf.mxu0
  %v1381 = vadd.f32 0.0, %v1380
  %v1382 = vpop.f32.mrf.mxu0
  %1383 = vdwg.mxu0
  %1384 = vmatpush.bf16.msra.mxu0 %v1349
  %1385 = vmatpush.bf16.msra.mxu0 %v1348
  %1386 = vmatpush.bf16.msra.mxu0 %v1347
  %1387 = vmatpush.bf16.msra.mxu0 %v1346
  %1388 = vmatpush.bf16.msra.mxu0 %v1345
  %1389 = vmatpush.bf16.msra.mxu0 %v1344
  %1390 = vmatpush.bf16.msra.mxu0 %v1343
  %1391 = vmatpush.bf16.msra.mxu0 %v1342
  %1392 = vmatmul.bf16.gmra.mxu0 %v1265
  %v1393 = vpop.f32.mrf.mxu0
  %v1394 = vadd.f32 %v1376, %v1393
  %v1395 = vpop.f32.mrf.mxu0
  %v1396 = vadd.f32 %v1378, %v1395
  %1397 = vmatmul.bf16.gmra.mxu0 %v1264
  %v1398 = vpop.f32.mrf.mxu0
  %v1399 = vadd.f32 %v1381, %v1398
  %v1400 = vpop.f32.mrf.mxu0
  %1401 = vdwg.mxu0
  %v1402 = vadd.f32 %v1212, %v1394
  %v1403 = vadd.f32 %v1214, %v1396
  %v1404 = vadd.f32 %v1217, %v1399
  %v1405 = vld [vmem:[%s597] sm:$0xf]
  %v1406 = vld [vmem:[%s597 + $0x4] sm:$0xf]
  %v1407 = vld [vmem:[%s597 + $0x8] sm:$0xf]
  %v1408 = vld [vmem:[%s597 + $0xc] sm:$0xf]
  %v1409 = vld [vmem:[%s597 + $0x10] sm:$0xf]
  %v1410 = vld [vmem:[%s597 + $0x14] sm:$0xf]
  %v1411 = vld [vmem:[%s597 + $0x18] sm:$0xf]
  %v1412 = vld [vmem:[%s597 + $0x1c] sm:$0xf]
  %v1413 = vld [vmem:[%s597 + $0x20] sm:$0xf]
  %v1414 = vld [vmem:[%s597 + $0x24] sm:$0xf]
  %v1415 = vld [vmem:[%s597 + $0x28] sm:$0xf]
  %v1416 = vld [vmem:[%s597 + $0x2c] sm:$0xf]
  %v1417 = vld [vmem:[%s597 + $0x30] sm:$0xf]
  %v1418 = vld [vmem:[%s597 + $0x34] sm:$0xf]
  %v1419 = vld [vmem:[%s597 + $0x38] sm:$0xf]
  %v1420 = vld [vmem:[%s597 + $0x3c] sm:$0xf]
  %v1421 = vld [vmem:[%s597 + $0x40] sm:$0xf]
  %v1422 = vld [vmem:[%s597 + $0x44] sm:$0xf]
  %v1423 = vld [vmem:[%s597 + $0x48] sm:$0xf]
  %v1424 = vld [vmem:[%s597 + $0x4c] sm:$0xf]
  %v1425 = vld [vmem:[%s597 + $0x50] sm:$0xf]
  %v1426 = vld [vmem:[%s597 + $0x54] sm:$0xf]
  %v1427 = vld [vmem:[%s597 + $0x58] sm:$0xf]
  %v1428 = vld [vmem:[%s597 + $0x5c] sm:$0xf]
  %v1429 = vld [vmem:[%s597 + $0x60] sm:$0xf]
  %v1430 = vld [vmem:[%s597 + $0x64] sm:$0xf]
  %v1431 = vld [vmem:[%s597 + $0x68] sm:$0xf]
  %v1432 = vld [vmem:[%s597 + $0x6c] sm:$0xf]
  %v1433 = vld [vmem:[%s597 + $0x70] sm:$0xf]
  %v1434 = vld [vmem:[%s597 + $0x74] sm:$0xf]
  %v1435 = vld [vmem:[%s597 + $0x78] sm:$0xf]
  %v1436 = vld [vmem:[%s597 + $0x7c] sm:$0xf]
  %v1437 = vrot.slane %v912, 3
  %v1438 = vrot.slane %v914, 3
  %v1439 = vsel %vm630, %v1437, %v1438
  %v1440 = vrot.slane %v913, 3
  %v1441 = vrot.slane %v915, 3
  %v1442 = vsel %vm630, %v1440, %v1441
  %v1479 = vunpack.c.l.b16 %v1405
  %v1480 = vunpack.c.l.b16 %v1406
  %v1481 = vunpack.c.l.b16 %v1407
  %v1482 = vunpack.c.l.b16 %v1408
  %v1483 = vunpack.c.l.b16 %v1409
  %v1484 = vunpack.c.l.b16 %v1410
  %v1485 = vunpack.c.l.b16 %v1411
  %v1486 = vunpack.c.l.b16 %v1412
  %v1487 = vunpack.c.l.b16 %v1413
  %v1488 = vunpack.c.l.b16 %v1414
  %v1489 = vunpack.c.l.b16 %v1415
  %v1490 = vunpack.c.l.b16 %v1416
  %v1491 = vunpack.c.l.b16 %v1417
  %v1492 = vunpack.c.l.b16 %v1418
  %v1493 = vunpack.c.l.b16 %v1419
  %v1494 = vunpack.c.l.b16 %v1420
  %v1495 = vunpack.c.l.b16 %v1421
  %v1496 = vunpack.c.l.b16 %v1422
  %v1497 = vunpack.c.l.b16 %v1423
  %v1498 = vunpack.c.l.b16 %v1424
  %v1499 = vunpack.c.l.b16 %v1425
  %v1500 = vunpack.c.l.b16 %v1426
  %v1501 = vunpack.c.l.b16 %v1427
  %v1502 = vunpack.c.l.b16 %v1428
  %v1503 = vunpack.c.l.b16 %v1429
  %v1504 = vunpack.c.l.b16 %v1430
  %v1505 = vunpack.c.l.b16 %v1431
  %v1506 = vunpack.c.l.b16 %v1432
  %v1507 = vunpack.c.l.b16 %v1433
  %v1508 = vunpack.c.l.b16 %v1434
  %v1509 = vunpack.c.l.b16 %v1435
  %v1510 = vunpack.c.l.b16 %v1436
  %v1511 = vpack.c.b16 %v1480, %v1479
  %v1512 = vpack.c.b16 %v1482, %v1481
  %v1513 = vpack.c.b16 %v1484, %v1483
  %v1514 = vpack.c.b16 %v1486, %v1485
  %v1515 = vpack.c.b16 %v1488, %v1487
  %v1516 = vpack.c.b16 %v1490, %v1489
  %v1517 = vpack.c.b16 %v1492, %v1491
  %v1518 = vpack.c.b16 %v1494, %v1493
  %v1519 = vpack.c.b16 %v1496, %v1495
  %v1520 = vpack.c.b16 %v1498, %v1497
  %v1521 = vpack.c.b16 %v1500, %v1499
  %v1522 = vpack.c.b16 %v1502, %v1501
  %v1523 = vpack.c.b16 %v1504, %v1503
  %v1524 = vpack.c.b16 %v1506, %v1505
  %v1525 = vpack.c.b16 %v1508, %v1507
  %v1526 = vpack.c.b16 %v1510, %v1509
  %1543 = vmatpush.bf16.msra.mxu0 %v1518
  %1544 = vmatpush.bf16.msra.mxu0 %v1517
  %1545 = vmatpush.bf16.msra.mxu0 %v1516
  %1546 = vmatpush.bf16.msra.mxu0 %v1515
  %1547 = vmatpush.bf16.msra.mxu0 %v1514
  %1548 = vmatpush.bf16.msra.mxu0 %v1513
  %1549 = vmatpush.bf16.msra.mxu0 %v1512
  %1550 = vmatpush.bf16.msra.mxu0 %v1511
  %1551 = vmatmul.bf16.gmra.mxu0 %v1439
  %v1552 = vpop.f32.mrf.mxu0
  %v1553 = vadd.f32 0.0, %v1552
  %v1554 = vpop.f32.mrf.mxu0
  %v1555 = vadd.f32 0.0, %v1554
  %1556 = vmatmul.bf16.gmra.mxu0 %v1438
  %v1557 = vpop.f32.mrf.mxu0
  %v1558 = vadd.f32 0.0, %v1557
  %v1559 = vpop.f32.mrf.mxu0
  %1560 = vdwg.mxu0
  %1561 = vmatpush.bf16.msra.mxu0 %v1526
  %1562 = vmatpush.bf16.msra.mxu0 %v1525
  %1563 = vmatpush.bf16.msra.mxu0 %v1524
  %1564 = vmatpush.bf16.msra.mxu0 %v1523
  %1565 = vmatpush.bf16.msra.mxu0 %v1522
  %1566 = vmatpush.bf16.msra.mxu0 %v1521
  %1567 = vmatpush.bf16.msra.mxu0 %v1520
  %1568 = vmatpush.bf16.msra.mxu0 %v1519
  %1569 = vmatmul.bf16.gmra.mxu0 %v1442
  %v1570 = vpop.f32.mrf.mxu0
  %v1571 = vadd.f32 %v1553, %v1570
  %v1572 = vpop.f32.mrf.mxu0
  %v1573 = vadd.f32 %v1555, %v1572
  %1574 = vmatmul.bf16.gmra.mxu0 %v1441
  %v1575 = vpop.f32.mrf.mxu0
  %v1576 = vadd.f32 %v1558, %v1575
  %v1577 = vpop.f32.mrf.mxu0
  %1578 = vdwg.mxu0
  %v1579 = vadd.f32 %v1402, %v1571
  %v1580 = vadd.f32 %v1403, %v1573
  %v1581 = vadd.f32 %v1404, %v1576
  %v1582 = vld [vmem:[%s2] sm:$0x1]
  %v1584 = vperm.slane %v1582, 0
  %v1586 = vadd.f32 %v1579, %v1584
  %v1587 = vadd.f32 %v1580, %v1584
  %v1588 = vadd.f32 %v1581, %v1584
  %v1589 = vpack.c.bf16 %v1586, %v1586
  %v1590 = vpack.c.bf16 %v1587, %v1587
  %v1591 = vpack.c.bf16 %v1588, %v1588
  %s1592 = scalar_lea.vmem %s4, 12
  %1593 = vst [vmem:[%s1592] sm:$0xf] %v1589
  %1594 = vst [vmem:[%s1592 + $0x4] sm:$0xf] %v1590
  %1595 = vst [vmem:[%s1592 + $0x8] sm:$0xf] %v1591
  %s1596 = scalar_lea.vmem %s3, 24
  %v1597 = vld [vmem:[%s1596] sm:$0xff]
  %v1598 = vld [vmem:[%s1596 + $0x8] sm:$0xff]
  %v1599 = vld [vmem:[%s1596 + $0x10] sm:$0xff]
  %1601 = vset.pattern.permute.xlu0 0
  %1602 = vperm.xlu0 %1601, %v1597
  %v1603 = vpop.permute.xlu0 %1602
  %1606 = vset.pattern.permute.xlu0 0
  %1607 = vperm.xlu0 %1606, %v1598
  %v1608 = vpop.permute.xlu0 %1607
  %1611 = vset.pattern.permute.xlu0 0
  %1612 = vperm.xlu0 %1611, %v1599
  %v1613 = vpop.permute.xlu0 %1612
  %v1615 = vmul.f32 %v1586, %v1603
  %v1616 = vmul.f32 %v1587, %v1608
  %v1617 = vmul.f32 %v1588, %v1613
  %v1618 = vadd.f32 %v1615, %v1616
  %v1619 = vadd.f32 %v1618, %v1617
  %v1620 = vrot.slane %v1619, 4
  %v1621 = vadd.f32 %v1619, %v1620
  %v1622 = vrot.slane %v1621, 2
  %v1623 = vadd.f32 %v1621, %v1622
  %v1624 = vrot.slane %v1623, 1
  %v1625 = vadd.f32 %v1623, %v1624
  %v1626 = vadd.f32 %v818, %v1625
  %v1627 = vmul.f32 %v1615, %v1615
  %v1628 = vmul.f32 %v1616, %v1616
  %v1629 = vmul.f32 %v1617, %v1617
  %v1630 = vadd.f32 %v1627, %v1628
  %v1631 = vadd.f32 %v1630, %v1629
  %v1632 = vrot.slane %v1631, 4
  %v1633 = vadd.f32 %v1631, %v1632
  %v1634 = vrot.slane %v1633, 2
  %v1635 = vadd.f32 %v1633, %v1634
  %v1636 = vrot.slane %v1635, 1
  %v1637 = vadd.f32 %v1635, %v1636
  %v1638 = vadd.f32 %v830, %v1637
  %1639 = vst [vmem:[%s5] sm:$0x1] %v1626
  %1640 = vst [vmem:[%s6] sm:$0x1] %v1638
  // Predicated region
  $region18: #{discriminator_forward.6} parent=0 // pred_check
    _
  $region19: #{discriminator_forward.6} parent=0 // pred_check_branch
    %1642 = sbr.rel (0) target = $region21
  $region20: #{discriminator_forward.6} parent=0 // pred_region
    _
  $region21: #{discriminator_forward.6} parent=0 // pred_fallthru
    _
  // Predicated region
  $region22: #{discriminator_forward.6} parent=0 // pred_check
    _
  $region23: #{discriminator_forward.6} parent=0 // pred_check_branch
    %1644 = sbr.rel (0) target = $region25
  $region24: #{discriminator_forward.6} parent=0 // pred_region
    _
  $region25: #{discriminator_forward.6} parent=0 // pred_fallthru
    _
  // Predicated region
  $region26: #{discriminator_forward.6} parent=0 // pred_check
    _
  $region27: #{discriminator_forward.6} parent=0 // pred_check_branch
    %1646 = sbr.rel (0) target = $region29
  $region28: #{discriminator_forward.6} parent=0 // pred_region
    _
  $region29: #{discriminator_forward.6} parent=0 // pred_fallthru
    _
  // Predicated region
  $region30: #{discriminator_forward.6} parent=0 // pred_check
    _
  $region31: #{discriminator_forward.6} parent=0 // pred_check_branch
    %1648 = sbr.rel (0) target = $region33
  $region32: #{discriminator_forward.6} parent=0 // pred_region
    _
  $region33: #{discriminator_forward.6} parent=0 // pred_fallthru
    _
  // Predicated region
  $region34: #{discriminator_forward.6} parent=0 // pred_check
    _
  $region35: #{discriminator_forward.6} parent=0 // pred_check_branch
    %1650 = sbr.rel (0) target = $region37
  $region36: #{discriminator_forward.6} parent=0 // pred_region
    _
  $region37: #{discriminator_forward.6} parent=0 // pred_fallthru
    _
  // Predicated region
  $region38: #{discriminator_forward.6} parent=0 // pred_check
    _
  $region39: #{discriminator_forward.6} parent=0 // pred_check_branch
    %1652 = sbr.rel (0) target = $region41
  $region40: #{discriminator_forward.6} parent=0 // pred_region
    _
  $region41: #{discriminator_forward.6} parent=0 // pred_fallthru
    _

</llo_original>
